<compile_context>
chip_gen: v6e
topology: v6e:2x2x1
jax: 0.10.0
libtpu: 0.0.40
codegen_flags: <defaults>
</compile_context>

<pallas_src>
import functools

import jax
import jax.numpy as jnp
from jax.experimental import pallas as pl
from jax.experimental.pallas import tpu as pltpu


def ff_norm_kernel(x_ref, w1_ref, b1_ref, w2_ref, b2_ref, o_ref, sum_ref, sq_ref,
                   *, block_n, matmul_dtype, eps):
    n = pl.program_id(1)
    n_last = pl.num_programs(1) - 1

    @pl.when(n == 0)
    def _init():
        sum_ref[...] = jnp.zeros_like(sum_ref)
        sq_ref[...] = jnp.zeros_like(sq_ref)

    x = x_ref[...]                                    # (block_n, D), input dtype
    xf = x.astype(jnp.float32)

    # FF1: Linear(D->H) -> ReLU -> Linear(H->D).  MXU matmuls in matmul_dtype with
    # f32 accumulation; bias / ReLU / residual in f32.
    h = jnp.dot(x.astype(matmul_dtype), w1_ref[...],
                preferred_element_type=jnp.float32)
    h = jnp.maximum(h + b1_ref[...].astype(jnp.float32), 0.0)
    # NOTE: for very large H an inner H-tile loop (lax.fori_loop + f32 VMEM
    # accumulator) would bound the (block_n, H) live range further.
    y = jnp.dot(h.astype(matmul_dtype), w2_ref[...],
                preferred_element_type=jnp.float32)
    r = y + b2_ref[...].astype(jnp.float32) + xf      # residual, f32

    # Fused one-pass normalization statistics (per-lane partials; final reduce at end).
    sum_ref[...] += jnp.sum(r, axis=0, keepdims=True)
    sq_ref[...] += jnp.sum(r * r, axis=0, keepdims=True)

    # Stage the un-normalized residual into the VMEM-resident output block.
    row0 = pl.multiple_of(n * block_n, block_n)
    o_ref[pl.ds(row0, block_n), :] = r.astype(o_ref.dtype)

    @pl.when(n == n_last)
    def _finalize():
        count = o_ref.shape[0] * o_ref.shape[1]        # N * D (python int)
        s1 = jnp.sum(sum_ref[...], axis=1, keepdims=True)   # (1, 1)
        s2 = jnp.sum(sq_ref[...], axis=1, keepdims=True)    # (1, 1)
        mean = s1 / count
        # unbiased variance (torch.var default, ddof=1), one-pass form
        var = (s2 - count * mean * mean) / (count - 1)
        scale = jax.lax.rsqrt(var + eps)               # one rsqrt per batch item
        rr = o_ref[...].astype(jnp.float32)
        o_ref[...] = ((rr - mean) * scale).astype(o_ref.dtype)


def ff_and_norm_sublayer(x, w1, b1, w2, b2, *, block_n=None,
                         matmul_dtype=jnp.bfloat16, eps=1e-5):
    """x: (B, N, D).  Weights stored pre-transposed as (in, out): w1 (D,H), w2 (H,D)."""
    B, N, D = x.shape
    H = w1.shape[1]
    assert w1.shape == (D, H) and w2.shape == (H, D)
    assert b1.shape == (1, H) and b2.shape == (1, D)

    if block_n is None:
        block_n = min(N, 256)          # 256-row tiles feed the v6e/v7x MXU; 128-friendly on v5e
    assert N % block_n == 0 and block_n % 8 == 0
    n_tiles = N // block_n

    # bf16 weights halve HBM/VMEM weight traffic and hit MXU bf16 peak on v6e/v7x.
    w1m = w1.astype(matmul_dtype)
    w2m = w2.astype(matmul_dtype)
    b1f = b1.astype(jnp.float32)
    b2f = b2.astype(jnp.float32)

    kernel = functools.partial(ff_norm_kernel, block_n=block_n,
                               matmul_dtype=matmul_dtype, eps=eps)

    act_bytes = jnp.dtype(x.dtype).itemsize
    w_bytes = jnp.dtype(matmul_dtype).itemsize
    vmem_est = (2 * block_n * D * act_bytes          # x tiles (double-buffered)
                + (D * H + H * D) * w_bytes          # weights (single-buffered)
                + 2 * (H + D) * 4                    # biases
                + 2 * N * D * act_bytes              # resident output block (x2)
                + 2 * block_n * H * 4                # hidden tile / spill headroom
                + 2 * D * 4)                         # stats scratch
    vmem_limit = min(max(int(vmem_est * 1.5), 32 * 1024 * 1024), 96 * 1024 * 1024)

    cost = pl.CostEstimate(
        flops=4 * B * N * D * H,                     # two matmuls: 2*B*N*D*H each
        transcendentals=B,                           # one rsqrt per batch item
        bytes_accessed=(x.size * act_bytes + (D * H + H * D) * w_bytes
                        + (H + D) * 4 + B * N * D * act_bytes),
    )

    def call(weight_pipeline_mode):
        def wspec(shape):
            if weight_pipeline_mode is None:
                return pl.BlockSpec(shape, lambda b, n: (0,) * len(shape))
            return pl.BlockSpec(shape, lambda b, n: (0,) * len(shape),
                                pipeline_mode=weight_pipeline_mode)

        grid_spec = pltpu.PrefetchScalarGridSpec(
            num_scalar_prefetch=0,
            grid=(B, n_tiles),
            in_specs=[
                pl.BlockSpec((None, block_n, D), lambda b, n: (b, n, 0)),  # x tile
                wspec((D, H)),                                             # W1
                wspec((1, H)),                                             # b1
                wspec((H, D)),                                             # W2
                wspec((1, D)),                                             # b2
            ],
            # Output block resident across the N axis (constant index), written back
            # to HBM once per batch item; last dim D stays lane-dense.
            out_specs=pl.BlockSpec((None, N, D), lambda b, n: (b, 0, 0)),
            scratch_shapes=[pltpu.VMEM((1, D), jnp.float32),   # sum(r) partials
                            pltpu.VMEM((1, D), jnp.float32)],  # sum(r*r) partials
        )
        return pl.pallas_call(
            kernel,
            out_shape=jax.ShapeDtypeStruct((B, N, D), x.dtype),
            grid_spec=grid_spec,
            compiler_params=pltpu.CompilerParams(
                dimension_semantics=("parallel", "arbitrary"),
                vmem_limit_bytes=vmem_limit,
            ),
            cost_estimate=cost,
        )(x, w1m, b1f, w2m, b2f)

    try:
        # Constant-index weights -> single-buffer them (saves half the weight VMEM;
        # matters most on v7x's 64 MiB VMEM).
        return call(pl.Buffered(1))
    except Exception:
        # Fallback for Pallas versions that reject single-buffered operands.
        return call(None)


def reference(x, w1, b1, w2, b2, matmul_dtype=jnp.float32, eps=1e-5):
    # Pure-JAX mirror of the PyTorch forward (layer-norm branch), with the same
    # matmul precision as the kernel under test.
    xm = x.astype(matmul_dtype)
    h = jnp.dot(xm, w1.astype(matmul_dtype), preferred_element_type=jnp.float32) + b1
    h = jnp.maximum(h, 0.0)
    y = jnp.dot(h.astype(matmul_dtype), w2.astype(matmul_dtype),
                preferred_element_type=jnp.float32) + b2
    r = y + x
    mean = r.mean(axis=(1, 2), keepdims=True)
    var = r.var(axis=(1, 2), ddof=1, keepdims=True)
    return (r - mean) / jnp.sqrt(var + eps)


if __name__ == "__main__":
    # Small but TPU-friendly shapes: batch=2, seq=128, embed_dim=128, hidden=256.
    # (embed_dim is a multiple of 128 so the output stays lane-dense.)
    B, N, D, H = 2, 128, 128, 256

    key = jax.random.PRNGKey(0)
    kx, k1, kb1, k2, kb2 = jax.random.split(key, 5)
    x = jax.random.normal(kx, (B, N, D), dtype=jnp.float32)

    # nn.Linear-style uniform(-stdv, stdv) init, stored pre-transposed as (in, out).
    stdv1 = 1.0 / (D ** 0.5)
    stdv2 = 1.0 / (H ** 0.5)
    w1 = jax.random.uniform(k1, (D, H), jnp.float32, -stdv1, stdv1)
    b1 = jax.random.uniform(kb1, (1, H), jnp.float32, -stdv1, stdv1)
    w2 = jax.random.uniform(k2, (H, D), jnp.float32, -stdv2, stdv2)
    b2 = jax.random.uniform(kb2, (1, D), jnp.float32, -stdv2, stdv2)

    # Default (performance) path: bf16 MXU matmuls, f32 epilogue.  block_n=32 so the
    # cross-tile statistics accumulation path is exercised (4 N-tiles per batch item).
    out = jax.block_until_ready(ff_and_norm_sublayer(x, w1, b1, w2, b2, block_n=32))
    ref_bf16 = reference(x, w1, b1, w2, b2, matmul_dtype=jnp.bfloat16)
    assert out.shape == (B, N, D)
    assert jnp.allclose(out, ref_bf16, atol=2e-3, rtol=2e-3), "mismatch vs bf16-matmul reference"

    # Exact-precision path (matches the PyTorch module's f32 forward).
    out_f32 = jax.block_until_ready(
        ff_and_norm_sublayer(x, w1, b1, w2, b2, block_n=32, matmul_dtype=jnp.float32))
    ref_f32 = reference(x, w1, b1, w2, b2, matmul_dtype=jnp.float32)
    assert jnp.allclose(out_f32, ref_f32, atol=1e-4, rtol=1e-4), "mismatch vs f32 reference"

    print("KERNEL_OK")
</pallas_src>

<mosaic_0001>
module attributes {stable_mosaic.version = 11 : i64} {
  func.func @ff_norm_kernel(%arg0: i32, %arg1: i32, %arg2: memref<1x32x128xf32, #tpu.memory_space<vmem>>, %arg3: memref<128x256xbf16, #tpu.memory_space<vmem>>, %arg4: memref<1x256xf32, #tpu.memory_space<vmem>>, %arg5: memref<256x128xbf16, #tpu.memory_space<vmem>>, %arg6: memref<1x128xf32, #tpu.memory_space<vmem>>, %arg7: memref<1x128x128xf32, #tpu.memory_space<vmem>>, %arg8: memref<1x128xf32, #tpu.memory_space<vmem>>, %arg9: memref<1x128xf32, #tpu.memory_space<vmem>>) attributes {dimension_semantics = [#tpu.dimension_semantics<parallel>, #tpu.dimension_semantics<arbitrary>], iteration_bounds = array<i64: 2, 4>, scalar_prefetch = 0 : i64, scratch_operands = 2 : i64, tpu.core_type = #tpu.core_type<tc>, window_params = [{transform_indices = @transform_0, window_bounds = array<i64: 1, 32, 128>}, {pipeline_mode = #tpu.pipeline_mode<synchronous>, transform_indices = @transform_1, window_bounds = array<i64: 128, 256>}, {pipeline_mode = #tpu.pipeline_mode<synchronous>, transform_indices = @transform_2, window_bounds = array<i64: 1, 256>}, {pipeline_mode = #tpu.pipeline_mode<synchronous>, transform_indices = @transform_3, window_bounds = array<i64: 256, 128>}, {pipeline_mode = #tpu.pipeline_mode<synchronous>, transform_indices = @transform_4, window_bounds = array<i64: 1, 128>}, {transform_indices = @transform_5, window_bounds = array<i64: 1, 128, 128>}]} {
    %c0_i32 = arith.constant 0 : i32
    %0 = arith.cmpi eq, %arg1, %c0_i32 : i32
    %1 = arith.extui %0 : i1 to i32
    %c0_i32_0 = arith.constant 0 : i32
    %2 = arith.cmpi ne, %1, %c0_i32_0 : i32
    scf.if %2 {
      %cst_26 = arith.constant 0.000000e+00 : f32
      %40 = vector.broadcast %cst_26 : f32 to vector<1x128xf32>
      %c0_27 = arith.constant 0 : index
      %c0_28 = arith.constant 0 : index
      %41 = vector.load %arg8[%c0_27, %c0_28] : memref<1x128xf32, #tpu.memory_space<vmem>>, vector<1x128xf32>
      tpu.vector_store %arg8[%c0_27, %c0_28], %40 {strides = array<i32>} : memref<1x128xf32, #tpu.memory_space<vmem>>, vector<1x128xf32>,
      %cst_29 = arith.constant 0.000000e+00 : f32
      %42 = vector.broadcast %cst_29 : f32 to vector<1x128xf32>
      %c0_30 = arith.constant 0 : index
      %c0_31 = arith.constant 0 : index
      %43 = vector.load %arg9[%c0_30, %c0_31] : memref<1x128xf32, #tpu.memory_space<vmem>>, vector<1x128xf32>
      tpu.vector_store %arg9[%c0_30, %c0_31], %42 {strides = array<i32>} : memref<1x128xf32, #tpu.memory_space<vmem>>, vector<1x128xf32>,
    } else {
    }
    %c0 = arith.constant 0 : index
    %c0_1 = arith.constant 0 : index
    %c0_2 = arith.constant 0 : index
    %3 = vector.load %arg2[%c0, %c0_1, %c0_2] : memref<1x32x128xf32, #tpu.memory_space<vmem>>, vector<1x32x128xf32>
    %4 = vector.shape_cast %3 : vector<1x32x128xf32> to vector<32x128xf32>
    %5 = arith.truncf %4 : vector<32x128xf32> to vector<32x128xbf16>
    %c0_3 = arith.constant 0 : index
    %c0_4 = arith.constant 0 : index
    %6 = vector.load %arg3[%c0_3, %c0_4] : memref<128x256xbf16, #tpu.memory_space<vmem>>, vector<128x256xbf16>
    %cst = arith.constant dense<0.000000e+00> : vector<32x256xf32>
    %7 = tpu.matmul %5, %6, %cst {dimension_numbers = #tpu.dot_dimension_numbers<[1], [0], [0], [1], [0, 0, 1, 1], [], []>} : vector<32x128xbf16>, vector<128x256xbf16>, vector<32x256xf32> -> vector<32x256xf32>
    %c0_5 = arith.constant 0 : index
    %c0_6 = arith.constant 0 : index
    %8 = vector.load %arg4[%c0_5, %c0_6] : memref<1x256xf32, #tpu.memory_space<vmem>>, vector<1x256xf32>
    %9 = vector.broadcast %8 : vector<1x256xf32> to vector<32x256xf32>
    %10 = arith.addf %7, %9 : vector<32x256xf32>
    %cst_7 = arith.constant 0.000000e+00 : f32
    %11 = vector.broadcast %cst_7 : f32 to vector<32x256xf32>
    %12 = arith.maximumf %10, %11 : vector<32x256xf32>
    %13 = arith.truncf %12 : vector<32x256xf32> to vector<32x256xbf16>
    %c0_8 = arith.constant 0 : index
    %c0_9 = arith.constant 0 : index
    %14 = vector.load %arg5[%c0_8, %c0_9] : memref<256x128xbf16, #tpu.memory_space<vmem>>, vector<256x128xbf16>
    %cst_10 = arith.constant dense<0.000000e+00> : vector<32x128xf32>
    %15 = tpu.matmul %13, %14, %cst_10 {dimension_numbers = #tpu.dot_dimension_numbers<[1], [0], [0], [1], [0, 0, 1, 1], [], []>} : vector<32x256xbf16>, vector<256x128xbf16>, vector<32x128xf32> -> vector<32x128xf32>
    %c0_11 = arith.constant 0 : index
    %c0_12 = arith.constant 0 : index
    %16 = vector.load %arg6[%c0_11, %c0_12] : memref<1x128xf32, #tpu.memory_space<vmem>>, vector<1x128xf32>
    %17 = vector.broadcast %16 : vector<1x128xf32> to vector<32x128xf32>
    %18 = arith.addf %15, %17 : vector<32x128xf32>
    %19 = arith.addf %18, %4 : vector<32x128xf32>
    %c0_13 = arith.constant 0 : index
    %c0_14 = arith.constant 0 : index
    %20 = vector.load %arg8[%c0_13, %c0_14] : memref<1x128xf32, #tpu.memory_space<vmem>>, vector<1x128xf32>
    %cst_15 = arith.constant dense<0.000000e+00> : vector<128xf32>
    %21 = vector.multi_reduction <add>, %19, %cst_15 [0] : vector<32x128xf32> to vector<128xf32>
    %22 = vector.shape_cast %21 : vector<128xf32> to vector<1x128xf32>
    %23 = arith.addf %20, %22 : vector<1x128xf32>
    %c0_16 = arith.constant 0 : index
    %c0_17 = arith.constant 0 : index
    %24 = vector.load %arg8[%c0_16, %c0_17] : memref<1x128xf32, #tpu.memory_space<vmem>>, vector<1x128xf32>
    tpu.vector_store %arg8[%c0_16, %c0_17], %23 {strides = array<i32>} : memref<1x128xf32, #tpu.memory_space<vmem>>, vector<1x128xf32>,
    %c0_18 = arith.constant 0 : index
    %c0_19 = arith.constant 0 : index
    %25 = vector.load %arg9[%c0_18, %c0_19] : memref<1x128xf32, #tpu.memory_space<vmem>>, vector<1x128xf32>
    %26 = arith.mulf %19, %19 : vector<32x128xf32>
    %cst_20 = arith.constant dense<0.000000e+00> : vector<128xf32>
    %27 = vector.multi_reduction <add>, %26, %cst_20 [0] : vector<32x128xf32> to vector<128xf32>
    %28 = vector.shape_cast %27 : vector<128xf32> to vector<1x128xf32>
    %29 = arith.addf %25, %28 : vector<1x128xf32>
    %c0_21 = arith.constant 0 : index
    %c0_22 = arith.constant 0 : index
    %30 = vector.load %arg9[%c0_21, %c0_22] : memref<1x128xf32, #tpu.memory_space<vmem>>, vector<1x128xf32>
    tpu.vector_store %arg9[%c0_21, %c0_22], %29 {strides = array<i32>} : memref<1x128xf32, #tpu.memory_space<vmem>>, vector<1x128xf32>,
    %c32_i32 = arith.constant 32 : i32
    %31 = arith.muli %arg1, %c32_i32 : i32
    %32 = tpu.assume_multiple %31, 32 : i32
    %c0_23 = arith.constant 0 : index
    %33 = arith.index_cast %32 : i32 to index
    %c0_24 = arith.constant 0 : index
    %34 = vector.load %arg7[%c0_23, %33, %c0_24] : memref<1x128x128xf32, #tpu.memory_space<vmem>>, vector<1x32x128xf32>
    %35 = vector.shape_cast %34 : vector<1x32x128xf32> to vector<32x128xf32>
    %36 = vector.shape_cast %19 : vector<32x128xf32> to vector<1x32x128xf32>
    tpu.vector_store %arg7[%c0_23, %33, %c0_24], %36 {strides = array<i32>} : memref<1x128x128xf32, #tpu.memory_space<vmem>>, vector<1x32x128xf32>,
    %c3_i32 = arith.constant 3 : i32
    %37 = arith.cmpi eq, %arg1, %c3_i32 : i32
    %38 = arith.extui %37 : i1 to i32
    %c0_i32_25 = arith.constant 0 : i32
    %39 = arith.cmpi ne, %38, %c0_i32_25 : i32
    scf.if %39 {
      %c0_26 = arith.constant 0 : index
      %c0_27 = arith.constant 0 : index
      %40 = vector.load %arg8[%c0_26, %c0_27] : memref<1x128xf32, #tpu.memory_space<vmem>>, vector<1x128xf32>
      %cst_28 = arith.constant dense<0.000000e+00> : vector<1xf32>
      %41 = vector.multi_reduction <add>, %40, %cst_28 [1] : vector<1x128xf32> to vector<1xf32>
      %42 = vector.shape_cast %41 : vector<1xf32> to vector<1x1xf32>
      %c0_29 = arith.constant 0 : index
      %c0_30 = arith.constant 0 : index
      %43 = vector.load %arg9[%c0_29, %c0_30] : memref<1x128xf32, #tpu.memory_space<vmem>>, vector<1x128xf32>
      %cst_31 = arith.constant dense<0.000000e+00> : vector<1xf32>
      %44 = vector.multi_reduction <add>, %43, %cst_31 [1] : vector<1x128xf32> to vector<1xf32>
      %45 = vector.shape_cast %44 : vector<1xf32> to vector<1x1xf32>
      %cst_32 = arith.constant 1.638400e+04 : f32
      %46 = vector.broadcast %cst_32 : f32 to vector<1x1xf32>
      %47 = arith.divf %42, %46 : vector<1x1xf32>
      %cst_33 = arith.constant 1.638400e+04 : f32
      %48 = vector.broadcast %cst_33 : f32 to vector<1x1xf32>
      %49 = arith.mulf %48, %47 : vector<1x1xf32>
      %50 = arith.mulf %49, %47 : vector<1x1xf32>
      %51 = arith.subf %45, %50 : vector<1x1xf32>
      %cst_34 = arith.constant 1.638300e+04 : f32
      %52 = vector.broadcast %cst_34 : f32 to vector<1x1xf32>
      %53 = arith.divf %51, %52 : vector<1x1xf32>
      %cst_35 = arith.constant 9.99999974E-6 : f32
      %54 = vector.broadcast %cst_35 : f32 to vector<1x1xf32>
      %55 = arith.addf %53, %54 : vector<1x1xf32>
      %56 = math.rsqrt %55 : vector<1x1xf32>
      %c0_36 = arith.constant 0 : index
      %c0_37 = arith.constant 0 : index
      %c0_38 = arith.constant 0 : index
      %57 = vector.load %arg7[%c0_36, %c0_37, %c0_38] : memref<1x128x128xf32, #tpu.memory_space<vmem>>, vector<1x128x128xf32>
      %58 = vector.shape_cast %57 : vector<1x128x128xf32> to vector<128x128xf32>
      %59 = vector.broadcast %47 : vector<1x1xf32> to vector<128x128xf32>
      %60 = arith.subf %58, %59 : vector<128x128xf32>
      %61 = vector.broadcast %56 : vector<1x1xf32> to vector<128x128xf32>
      %62 = arith.mulf %60, %61 : vector<128x128xf32>
      %c0_39 = arith.constant 0 : index
      %c0_40 = arith.constant 0 : index
      %c0_41 = arith.constant 0 : index
      %63 = vector.load %arg7[%c0_39, %c0_40, %c0_41] : memref<1x128x128xf32, #tpu.memory_space<vmem>>, vector<1x128x128xf32>
      %64 = vector.shape_cast %63 : vector<1x128x128xf32> to vector<128x128xf32>
      %65 = vector.shape_cast %62 : vector<128x128xf32> to vector<1x128x128xf32>
      tpu.vector_store %arg7[%c0_39, %c0_40, %c0_41], %65 {strides = array<i32>} : memref<1x128x128xf32, #tpu.memory_space<vmem>>, vector<1x128x128xf32>,
    } else {
    }
    return
  }
  func.func @transform_0(%arg0: i32, %arg1: i32) -> (i32, i32, i32) {
    %c0_i32 = arith.constant 0 : i32
    %c0_i32_0 = arith.constant 0 : i32
    return %arg0, %arg1, %c0_i32 : i32, i32, i32
  }
  func.func @transform_1(%arg0: i32, %arg1: i32) -> (i32, i32) {
    %c0_i32 = arith.constant 0 : i32
    %c0_i32_0 = arith.constant 0 : i32
    %c0_i32_1 = arith.constant 0 : i32
    return %c0_i32, %c0_i32_0 : i32, i32
  }
  func.func @transform_2(%arg0: i32, %arg1: i32) -> (i32, i32) {
    %c0_i32 = arith.constant 0 : i32
    %c0_i32_0 = arith.constant 0 : i32
    %c0_i32_1 = arith.constant 0 : i32
    return %c0_i32, %c0_i32_0 : i32, i32
  }
  func.func @transform_3(%arg0: i32, %arg1: i32) -> (i32, i32) {
    %c0_i32 = arith.constant 0 : i32
    %c0_i32_0 = arith.constant 0 : i32
    %c0_i32_1 = arith.constant 0 : i32
    return %c0_i32, %c0_i32_0 : i32, i32
  }
  func.func @transform_4(%arg0: i32, %arg1: i32) -> (i32, i32) {
    %c0_i32 = arith.constant 0 : i32
    %c0_i32_0 = arith.constant 0 : i32
    %c0_i32_1 = arith.constant 0 : i32
    return %c0_i32, %c0_i32_0 : i32, i32
  }
  func.func @transform_5(%arg0: i32, %arg1: i32) -> (i32, i32, i32) {
    %c0_i32 = arith.constant 0 : i32
    %c0_i32_0 = arith.constant 0 : i32
    %c0_i32_1 = arith.constant 0 : i32
    return %arg0, %c0_i32, %c0_i32_0 : i32, i32, i32
  }
}

module attributes {stable_mosaic.version = 11 : i64} {
  func.func @ff_norm_kernel(%arg0: i32, %arg1: i32, %arg2: memref<1x32x128xf32, #tpu.memory_space<vmem>>, %arg3: memref<128x256xbf16, #tpu.memory_space<vmem>>, %arg4: memref<1x256xf32, #tpu.memory_space<vmem>>, %arg5: memref<256x128xbf16, #tpu.memory_space<vmem>>, %arg6: memref<1x128xf32, #tpu.memory_space<vmem>>, %arg7: memref<1x128x128xf32, #tpu.memory_space<vmem>>, %arg8: memref<1x128xf32, #tpu.memory_space<vmem>>, %arg9: memref<1x128xf32, #tpu.memory_space<vmem>>) attributes {dimension_semantics = [#tpu.dimension_semantics<parallel>, #tpu.dimension_semantics<arbitrary>], iteration_bounds = array<i64: 2, 4>, scalar_prefetch = 0 : i64, scratch_operands = 2 : i64, tpu.core_type = #tpu.core_type<tc>, window_params = [{transform_indices = @transform_0, window_bounds = array<i64: 1, 32, 128>}, {pipeline_mode = #tpu.pipeline_mode<synchronous>, transform_indices = @transform_1, window_bounds = array<i64: 128, 256>}, {pipeline_mode = #tpu.pipeline_mode<synchronous>, transform_indices = @transform_2, window_bounds = array<i64: 1, 256>}, {pipeline_mode = #tpu.pipeline_mode<synchronous>, transform_indices = @transform_3, window_bounds = array<i64: 256, 128>}, {pipeline_mode = #tpu.pipeline_mode<synchronous>, transform_indices = @transform_4, window_bounds = array<i64: 1, 128>}, {transform_indices = @transform_5, window_bounds = array<i64: 1, 128, 128>}]} {
    %c0_i32 = arith.constant 0 : i32
    %0 = arith.cmpi eq, %arg1, %c0_i32 : i32
    %1 = arith.extui %0 : i1 to i32
    %c0_i32_0 = arith.constant 0 : i32
    %2 = arith.cmpi ne, %1, %c0_i32_0 : i32
    scf.if %2 {
      %cst_26 = arith.constant 0.000000e+00 : f32
      %40 = vector.broadcast %cst_26 : f32 to vector<1x128xf32>
      %c0_27 = arith.constant 0 : index
      %c0_28 = arith.constant 0 : index
      %41 = vector.load %arg8[%c0_27, %c0_28] : memref<1x128xf32, #tpu.memory_space<vmem>>, vector<1x128xf32>
      tpu.vector_store %arg8[%c0_27, %c0_28], %40 {strides = array<i32>} : memref<1x128xf32, #tpu.memory_space<vmem>>, vector<1x128xf32>,
      %cst_29 = arith.constant 0.000000e+00 : f32
      %42 = vector.broadcast %cst_29 : f32 to vector<1x128xf32>
      %c0_30 = arith.constant 0 : index
      %c0_31 = arith.constant 0 : index
      %43 = vector.load %arg9[%c0_30, %c0_31] : memref<1x128xf32, #tpu.memory_space<vmem>>, vector<1x128xf32>
      tpu.vector_store %arg9[%c0_30, %c0_31], %42 {strides = array<i32>} : memref<1x128xf32, #tpu.memory_space<vmem>>, vector<1x128xf32>,
    } else {
    }
    %c0 = arith.constant 0 : index
    %c0_1 = arith.constant 0 : index
    %c0_2 = arith.constant 0 : index
    %3 = vector.load %arg2[%c0, %c0_1, %c0_2] : memref<1x32x128xf32, #tpu.memory_space<vmem>>, vector<1x32x128xf32>
    %4 = vector.shape_cast %3 : vector<1x32x128xf32> to vector<32x128xf32>
    %5 = arith.truncf %4 : vector<32x128xf32> to vector<32x128xbf16>
    %c0_3 = arith.constant 0 : index
    %c0_4 = arith.constant 0 : index
    %6 = vector.load %arg3[%c0_3, %c0_4] : memref<128x256xbf16, #tpu.memory_space<vmem>>, vector<128x256xbf16>
    %cst = arith.constant dense<0.000000e+00> : vector<32x256xf32>
    %7 = tpu.matmul %5, %6, %cst {dimension_numbers = #tpu.dot_dimension_numbers<[1], [0], [0], [1], [0, 0, 1, 1], [], []>} : vector<32x128xbf16>, vector<128x256xbf16>, vector<32x256xf32> -> vector<32x256xf32>
    %c0_5 = arith.constant 0 : index
    %c0_6 = arith.constant 0 : index
    %8 = vector.load %arg4[%c0_5, %c0_6] : memref<1x256xf32, #tpu.memory_space<vmem>>, vector<1x256xf32>
    %9 = vector.broadcast %8 : vector<1x256xf32> to vector<32x256xf32>
    %10 = arith.addf %7, %9 : vector<32x256xf32>
    %cst_7 = arith.constant 0.000000e+00 : f32
    %11 = vector.broadcast %cst_7 : f32 to vector<32x256xf32>
    %12 = arith.maximumf %10, %11 : vector<32x256xf32>
    %13 = arith.truncf %12 : vector<32x256xf32> to vector<32x256xbf16>
    %c0_8 = arith.constant 0 : index
    %c0_9 = arith.constant 0 : index
    %14 = vector.load %arg5[%c0_8, %c0_9] : memref<256x128xbf16, #tpu.memory_space<vmem>>, vector<256x128xbf16>
    %cst_10 = arith.constant dense<0.000000e+00> : vector<32x128xf32>
    %15 = tpu.matmul %13, %14, %cst_10 {dimension_numbers = #tpu.dot_dimension_numbers<[1], [0], [0], [1], [0, 0, 1, 1], [], []>} : vector<32x256xbf16>, vector<256x128xbf16>, vector<32x128xf32> -> vector<32x128xf32>
    %c0_11 = arith.constant 0 : index
    %c0_12 = arith.constant 0 : index
    %16 = vector.load %arg6[%c0_11, %c0_12] : memref<1x128xf32, #tpu.memory_space<vmem>>, vector<1x128xf32>
    %17 = vector.broadcast %16 : vector<1x128xf32> to vector<32x128xf32>
    %18 = arith.addf %15, %17 : vector<32x128xf32>
    %19 = arith.addf %18, %4 : vector<32x128xf32>
    %c0_13 = arith.constant 0 : index
    %c0_14 = arith.constant 0 : index
    %20 = vector.load %arg8[%c0_13, %c0_14] : memref<1x128xf32, #tpu.memory_space<vmem>>, vector<1x128xf32>
    %cst_15 = arith.constant dense<0.000000e+00> : vector<128xf32>
    %21 = vector.multi_reduction <add>, %19, %cst_15 [0] : vector<32x128xf32> to vector<128xf32>
    %22 = vector.shape_cast %21 : vector<128xf32> to vector<1x128xf32>
    %23 = arith.addf %20, %22 : vector<1x128xf32>
    %c0_16 = arith.constant 0 : index
    %c0_17 = arith.constant 0 : index
    %24 = vector.load %arg8[%c0_16, %c0_17] : memref<1x128xf32, #tpu.memory_space<vmem>>, vector<1x128xf32>
    tpu.vector_store %arg8[%c0_16, %c0_17], %23 {strides = array<i32>} : memref<1x128xf32, #tpu.memory_space<vmem>>, vector<1x128xf32>,
    %c0_18 = arith.constant 0 : index
    %c0_19 = arith.constant 0 : index
    %25 = vector.load %arg9[%c0_18, %c0_19] : memref<1x128xf32, #tpu.memory_space<vmem>>, vector<1x128xf32>
    %26 = arith.mulf %19, %19 : vector<32x128xf32>
    %cst_20 = arith.constant dense<0.000000e+00> : vector<128xf32>
    %27 = vector.multi_reduction <add>, %26, %cst_20 [0] : vector<32x128xf32> to vector<128xf32>
    %28 = vector.shape_cast %27 : vector<128xf32> to vector<1x128xf32>
    %29 = arith.addf %25, %28 : vector<1x128xf32>
    %c0_21 = arith.constant 0 : index
    %c0_22 = arith.constant 0 : index
    %30 = vector.load %arg9[%c0_21, %c0_22] : memref<1x128xf32, #tpu.memory_space<vmem>>, vector<1x128xf32>
    tpu.vector_store %arg9[%c0_21, %c0_22], %29 {strides = array<i32>} : memref<1x128xf32, #tpu.memory_space<vmem>>, vector<1x128xf32>,
    %c32_i32 = arith.constant 32 : i32
    %31 = arith.muli %arg1, %c32_i32 : i32
    %32 = tpu.assume_multiple %31, 32 : i32
    %c0_23 = arith.constant 0 : index
    %33 = arith.index_cast %32 : i32 to index
    %c0_24 = arith.constant 0 : index
    %34 = vector.load %arg7[%c0_23, %33, %c0_24] : memref<1x128x128xf32, #tpu.memory_space<vmem>>, vector<1x32x128xf32>
    %35 = vector.shape_cast %34 : vector<1x32x128xf32> to vector<32x128xf32>
    %36 = vector.shape_cast %19 : vector<32x128xf32> to vector<1x32x128xf32>
    tpu.vector_store %arg7[%c0_23, %33, %c0_24], %36 {strides = array<i32>} : memref<1x128x128xf32, #tpu.memory_space<vmem>>, vector<1x32x128xf32>,
    %c3_i32 = arith.constant 3 : i32
    %37 = arith.cmpi eq, %arg1, %c3_i32 : i32
    %38 = arith.extui %37 : i1 to i32
    %c0_i32_25 = arith.constant 0 : i32
    %39 = arith.cmpi ne, %38, %c0_i32_25 : i32
    scf.if %39 {
      %c0_26 = arith.constant 0 : index
      %c0_27 = arith.constant 0 : index
      %40 = vector.load %arg8[%c0_26, %c0_27] : memref<1x128xf32, #tpu.memory_space<vmem>>, vector<1x128xf32>
      %cst_28 = arith.constant dense<0.000000e+00> : vector<1xf32>
      %41 = vector.multi_reduction <add>, %40, %cst_28 [1] : vector<1x128xf32> to vector<1xf32>
      %42 = vector.shape_cast %41 : vector<1xf32> to vector<1x1xf32>
      %c0_29 = arith.constant 0 : index
      %c0_30 = arith.constant 0 : index
      %43 = vector.load %arg9[%c0_29, %c0_30] : memref<1x128xf32, #tpu.memory_space<vmem>>, vector<1x128xf32>
      %cst_31 = arith.constant dense<0.000000e+00> : vector<1xf32>
      %44 = vector.multi_reduction <add>, %43, %cst_31 [1] : vector<1x128xf32> to vector<1xf32>
      %45 = vector.shape_cast %44 : vector<1xf32> to vector<1x1xf32>
      %cst_32 = arith.constant 1.638400e+04 : f32
      %46 = vector.broadcast %cst_32 : f32 to vector<1x1xf32>
      %47 = arith.divf %42, %46 : vector<1x1xf32>
      %cst_33 = arith.constant 1.638400e+04 : f32
      %48 = vector.broadcast %cst_33 : f32 to vector<1x1xf32>
      %49 = arith.mulf %48, %47 : vector<1x1xf32>
      %50 = arith.mulf %49, %47 : vector<1x1xf32>
      %51 = arith.subf %45, %50 : vector<1x1xf32>
      %cst_34 = arith.constant 1.638300e+04 : f32
      %52 = vector.broadcast %cst_34 : f32 to vector<1x1xf32>
      %53 = arith.divf %51, %52 : vector<1x1xf32>
      %cst_35 = arith.constant 9.99999974E-6 : f32
      %54 = vector.broadcast %cst_35 : f32 to vector<1x1xf32>
      %55 = arith.addf %53, %54 : vector<1x1xf32>
      %56 = math.rsqrt %55 : vector<1x1xf32>
      %c0_36 = arith.constant 0 : index
      %c0_37 = arith.constant 0 : index
      %c0_38 = arith.constant 0 : index
      %57 = vector.load %arg7[%c0_36, %c0_37, %c0_38] : memref<1x128x128xf32, #tpu.memory_space<vmem>>, vector<1x128x128xf32>
      %58 = vector.shape_cast %57 : vector<1x128x128xf32> to vector<128x128xf32>
      %59 = vector.broadcast %47 : vector<1x1xf32> to vector<128x128xf32>
      %60 = arith.subf %58, %59 : vector<128x128xf32>
      %61 = vector.broadcast %56 : vector<1x1xf32> to vector<128x128xf32>
      %62 = arith.mulf %60, %61 : vector<128x128xf32>
      %c0_39 = arith.constant 0 : index
      %c0_40 = arith.constant 0 : index
      %c0_41 = arith.constant 0 : index
      %63 = vector.load %arg7[%c0_39, %c0_40, %c0_41] : memref<1x128x128xf32, #tpu.memory_space<vmem>>, vector<1x128x128xf32>
      %64 = vector.shape_cast %63 : vector<1x128x128xf32> to vector<128x128xf32>
      %65 = vector.shape_cast %62 : vector<128x128xf32> to vector<1x128x128xf32>
      tpu.vector_store %arg7[%c0_39, %c0_40, %c0_41], %65 {strides = array<i32>} : memref<1x128x128xf32, #tpu.memory_space<vmem>>, vector<1x128x128xf32>,
    } else {
    }
    return
  }
  func.func @transform_0(%arg0: i32, %arg1: i32) -> (i32, i32, i32) {
    %c0_i32 = arith.constant 0 : i32
    %c0_i32_0 = arith.constant 0 : i32
    return %arg0, %arg1, %c0_i32 : i32, i32, i32
  }
  func.func @transform_1(%arg0: i32, %arg1: i32) -> (i32, i32) {
    %c0_i32 = arith.constant 0 : i32
    %c0_i32_0 = arith.constant 0 : i32
    %c0_i32_1 = arith.constant 0 : i32
    return %c0_i32, %c0_i32_0 : i32, i32
  }
  func.func @transform_2(%arg0: i32, %arg1: i32) -> (i32, i32) {
    %c0_i32 = arith.constant 0 : i32
    %c0_i32_0 = arith.constant 0 : i32
    %c0_i32_1 = arith.constant 0 : i32
    return %c0_i32, %c0_i32_0 : i32, i32
  }
  func.func @transform_3(%arg0: i32, %arg1: i32) -> (i32, i32) {
    %c0_i32 = arith.constant 0 : i32
    %c0_i32_0 = arith.constant 0 : i32
    %c0_i32_1 = arith.constant 0 : i32
    return %c0_i32, %c0_i32_0 : i32, i32
  }
  func.func @transform_4(%arg0: i32, %arg1: i32) -> (i32, i32) {
    %c0_i32 = arith.constant 0 : i32
    %c0_i32_0 = arith.constant 0 : i32
    %c0_i32_1 = arith.constant 0 : i32
    return %c0_i32, %c0_i32_0 : i32, i32
  }
  func.func @transform_5(%arg0: i32, %arg1: i32) -> (i32, i32, i32) {
    %c0_i32 = arith.constant 0 : i32
    %c0_i32_0 = arith.constant 0 : i32
    %c0_i32_1 = arith.constant 0 : i32
    return %arg0, %c0_i32, %c0_i32_0 : i32, i32, i32
  }
}

</mosaic_0001>

<llo_original>
// kernel: tpu_custom_call.1
$region0: #{tpu_custom_call.1}
  #allocation0 [shape = 'u32[]', space=smem, size = 0x4, offset = 0x4, fixed_abs, tag = 'smem constant byte address 0x4 - core index']
  #allocation1 [shape = 'u32[144,128]{1,0:T(1,128)}', space=vmem, size = 0x12000, scoped, tag = 'internal scratch']
  #allocation2 [shape = 'f32[1,128]{1,0:T(1,128)}', space=vmem, size = 0x200, scoped, tag = 'scratch operand']
  #allocation3 [shape = 'f32[1,128]{1,0:T(1,128)}', space=vmem, size = 0x200, scoped, tag = 'scratch operand']
  %s0 = inlined_call_operand.hbm [shape: f32[2,128,128], index: 0, kind: input, shape index: {}]
  %s1 = inlined_call_operand.hbm [shape: bf16[128,256], index: 1, kind: input, shape index: {}]
  %s2 = inlined_call_operand.vmem [shape: f32[1,256], index: 2, kind: input, shape index: {}]
  %s3 = inlined_call_operand.hbm [shape: bf16[256,128], index: 3, kind: input, shape index: {}]
  %s4 = inlined_call_operand.vmem [shape: f32[1,128], index: 4, kind: input, shape index: {}]
  %s5 = inlined_call_operand.hbm [shape: f32[2,128,128], index: 5, kind: output, shape index: {}]
  %s6 = sld [smem:[#allocation0]]
  $region73: #{tpu_custom_call.1} parent=0
    _
  %s8 = ssub.s32 1, %s6
  %s9 = scalar_select 0, %s8, %s6
  $region1: #{tpu_custom_call.1} parent=0
    #allocation4 [shape = 'u8[32768]{0}', space=vmem, size = 0x8000, scoped, tag = 'input window, operand 0']
    #allocation5 [shape = 's32[2]{0}', space=sflag, size = 0x8, scoped, tag = 'scoped memory for tpu_custom_call.1']
    #allocation6 [shape = 's32[2]{0}', space=sflag, size = 0x8, scoped, tag = 'scoped memory for tpu_custom_call.1']
    #allocation7 [shape = 'u8[65536]{0}', space=vmem, size = 0x10000, scoped, tag = 'input window, operand 1, single buffered']
    #allocation8 [shape = 's32[1]{0}', space=sflag, size = 0x4, scoped, tag = 'scoped memory for tpu_custom_call.1']
    #allocation9 [shape = 'u8[65536]{0}', space=vmem, size = 0x10000, scoped, tag = 'input window, operand 3, single buffered']
    #allocation10 [shape = 'u8[131072]{0}', space=vmem, size = 0x20000, scoped, tag = 'output window, operand 0']
    %10 = vsyncpa [#allocation5], 0
    %s11 = scalar_lea.sflag [#allocation5], 1
    %12 = vsyncpa %s11, 0
    %13 = vsyncpa [#allocation8], 0
    %14 = vsyncpa [#allocation6], 0
    %s15 = scalar_lea.sflag [#allocation6], 1
    %16 = vsyncpa %s15, 0
    loop: start=0, step=1, limit=10
    $region2: #{tpu_custom_call.1} parent=1 // loop_pre_header
      _
    $region3: #{tpu_custom_call.1} parent=1 // loop_header
      %s18 = sphi 0, %s22
      %p19 = scmp.ge.s32.totalorder %s18, 10
      %s25 = sphi 0, %s37
      %s26 = sphi 0, %s33
      %s27 = sphi 0, %s25
      %s28 = sphi 0, %s26
      %s29 = sphi 0, %s27
      %s30 = sphi 0, %s28
      %s42 = sphi 0, %s44
      %s45 = sphi 0, %s42
      %s46 = sphi 0, %s45
      %s62 = sphi 0, %s46
      %s66 = sphi 0, %s66
      %s68 = sphi 0, %s66
      %s69 = sphi 0, %s68
      %s83 = sphi 0, %s69
      %s87 = sphi 0, %s87
      %s89 = sphi 0, %s87
      %s90 = sphi 0, %s89
      %s104 = sphi 0, %s90
      %s108 = sphi 0, %s108
      %s110 = sphi 0, %s108
      %s111 = sphi 0, %s110
      %s125 = sphi 0, %s111
      %s129 = sphi 0, %s129
      %s131 = sphi 0, %s129
      %s132 = sphi 0, %s131
      %s146 = sphi 0, %s132
      %s152 = sphi 0, %s154
      %s155 = sphi 0, %s152
      %s156 = sphi 0, %s155
      %s172 = sphi 0, %s156
    $region4: #{tpu_custom_call.1} parent=1 // loop_header_branch
      %21 = sbr.rel (%p19) target = $region8
    $region5: #{tpu_custom_call.1} parent=1 // loop_body
      %s23 = ssub.s32 %s18, 1
      %s24 = ssub.s32 %s18, 2
      %s31 = sadd.s32 1, %s26
      %p32 = scmp.ge.s32.totalorder %s31, 4
      %s33 = scalar_select %p32, 0, %s31
      %s34 = sadd.s32 1, %s25
      %s35 = scalar_select %p32, %s34, %s25
      %p36 = scmp.ge.s32.totalorder %s35, 2
      %s37 = scalar_select %p36, 0, %s35
      %s38 = ssub.s32 %s25, %s37
      %s39 = ssub.s32 %s26, %s33
      %s40 = sor.u32 %s38, %s39
      %p41 = scmp.eq.s32.totalorder %s40, 0
      %s43 = sadd.s32 %s42, 1
      %s44 = scalar_select %p41, %s42, %s43
      %p47 = pneg %p41
      %p48 = scmp.eq.s32.totalorder %s18, 7
      %p49 = por %p47, %p48
      %p50 = scmp.ne.s32.totalorder %s42, %s45
      %p51 = scmp.eq.s32.totalorder %s18, 0
      %p52 = por %p50, %p51
      %p53 = scmp.ne.s32.totalorder %s42, %s45
      %p54 = scmp.eq.s32.totalorder %s23, 7
      %p55 = por %p53, %p54
      %p56 = scmp.ne.s32.totalorder %s45, %s46
      %p57 = scmp.eq.s32.totalorder %s23, 0
      %p58 = por %p56, %p57
      %p59 = scmp.ne.s32.totalorder %s45, %s46
      %p60 = scmp.eq.s32.totalorder %s24, 7
      %p61 = por %p59, %p60
      %p63 = scmp.ne.s32.totalorder %s46, %s62
      %p64 = scmp.eq.s32.totalorder %s24, 0
      %p65 = por %p63, %p64
      %s67 = sadd.s32 %s66, 1
      %p70 = scmp.eq.s32.totalorder %s18, 7
      %p71 = scmp.ne.s32.totalorder %s66, %s68
      %p72 = scmp.eq.s32.totalorder %s18, 0
      %p73 = por %p71, %p72
      %p74 = scmp.ne.s32.totalorder %s66, %s68
      %p75 = scmp.eq.s32.totalorder %s23, 7
      %p76 = por %p74, %p75
      %p77 = scmp.ne.s32.totalorder %s68, %s69
      %p78 = scmp.eq.s32.totalorder %s23, 0
      %p79 = por %p77, %p78
      %p80 = scmp.ne.s32.totalorder %s68, %s69
      %p81 = scmp.eq.s32.totalorder %s24, 7
      %p82 = por %p80, %p81
      %p84 = scmp.ne.s32.totalorder %s69, %s83
      %p85 = scmp.eq.s32.totalorder %s24, 0
      %p86 = por %p84, %p85
      %s88 = sadd.s32 %s87, 1
      %p91 = scmp.eq.s32.totalorder %s18, 7
      %p92 = scmp.ne.s32.totalorder %s87, %s89
      %p93 = scmp.eq.s32.totalorder %s18, 0
      %p94 = por %p92, %p93
      %p95 = scmp.ne.s32.totalorder %s87, %s89
      %p96 = scmp.eq.s32.totalorder %s23, 7
      %p97 = por %p95, %p96
      %p98 = scmp.ne.s32.totalorder %s89, %s90
      %p99 = scmp.eq.s32.totalorder %s23, 0
      %p100 = por %p98, %p99
      %p101 = scmp.ne.s32.totalorder %s89, %s90
      %p102 = scmp.eq.s32.totalorder %s24, 7
      %p103 = por %p101, %p102
      %p105 = scmp.ne.s32.totalorder %s90, %s104
      %p106 = scmp.eq.s32.totalorder %s24, 0
      %p107 = por %p105, %p106
      %s109 = sadd.s32 %s108, 1
      %p112 = scmp.eq.s32.totalorder %s18, 7
      %p113 = scmp.ne.s32.totalorder %s108, %s110
      %p114 = scmp.eq.s32.totalorder %s18, 0
      %p115 = por %p113, %p114
      %p116 = scmp.ne.s32.totalorder %s108, %s110
      %p117 = scmp.eq.s32.totalorder %s23, 7
      %p118 = por %p116, %p117
      %p119 = scmp.ne.s32.totalorder %s110, %s111
      %p120 = scmp.eq.s32.totalorder %s23, 0
      %p121 = por %p119, %p120
      %p122 = scmp.ne.s32.totalorder %s110, %s111
      %p123 = scmp.eq.s32.totalorder %s24, 7
      %p124 = por %p122, %p123
      %p126 = scmp.ne.s32.totalorder %s111, %s125
      %p127 = scmp.eq.s32.totalorder %s24, 0
      %p128 = por %p126, %p127
      %s130 = sadd.s32 %s129, 1
      %p133 = scmp.eq.s32.totalorder %s18, 7
      %p134 = scmp.ne.s32.totalorder %s129, %s131
      %p135 = scmp.eq.s32.totalorder %s18, 0
      %p136 = por %p134, %p135
      %p137 = scmp.ne.s32.totalorder %s129, %s131
      %p138 = scmp.eq.s32.totalorder %s23, 7
      %p139 = por %p137, %p138
      %p140 = scmp.ne.s32.totalorder %s131, %s132
      %p141 = scmp.eq.s32.totalorder %s23, 0
      %p142 = por %p140, %p141
      %p143 = scmp.ne.s32.totalorder %s131, %s132
      %p144 = scmp.eq.s32.totalorder %s24, 7
      %p145 = por %p143, %p144
      %p147 = scmp.ne.s32.totalorder %s132, %s146
      %p148 = scmp.eq.s32.totalorder %s24, 0
      %p149 = por %p147, %p148
      %s150 = ssub.s32 %s25, %s37
      %p151 = scmp.eq.s32.totalorder %s150, 0
      %s153 = sadd.s32 %s152, 1
      %s154 = scalar_select %p151, %s152, %s153
      %p157 = pneg %p151
      %p158 = scmp.eq.s32.totalorder %s18, 7
      %p159 = por %p157, %p158
      %p160 = scmp.ne.s32.totalorder %s152, %s155
      %p161 = scmp.eq.s32.totalorder %s18, 0
      %p162 = por %p160, %p161
      %p163 = scmp.ne.s32.totalorder %s152, %s155
      %p164 = scmp.eq.s32.totalorder %s23, 7
      %p165 = por %p163, %p164
      %p166 = scmp.ne.s32.totalorder %s155, %s156
      %p167 = scmp.eq.s32.totalorder %s23, 0
      %p168 = por %p166, %p167
      %p169 = scmp.ne.s32.totalorder %s155, %s156
      %p170 = scmp.eq.s32.totalorder %s24, 7
      %p171 = por %p169, %p170
      %p173 = scmp.ne.s32.totalorder %s156, %s172
      %p174 = scmp.eq.s32.totalorder %s24, 0
      %p175 = por %p173, %p174
      %p176 = scmp.le.s32.totalorder 1, %s18
      %p177 = scmp.lt.s32.totalorder %s18, 9
      %p178 = pnand %p176, %p177
      %p179 = pneg %p178
      // Predicated region
      $region9: #{tpu_custom_call.1} parent=5 // pred_check
        _
      $region10: #{tpu_custom_call.1} parent=5 // pred_check_branch
        %181 = sbr.rel (%p178) target = $region12
      $region11: #{tpu_custom_call.1} parent=5 // pred_region
        %s182 = ssub.s32 %s18, 1
        // Predicated region
        $region13: #{tpu_custom_call.1} parent=11 // pred_check
          %p183 = pneg %p79
        $region14: #{tpu_custom_call.1} parent=11 // pred_check_branch
          %185 = sbr.rel (%p183) target = $region16
        $region15: #{tpu_custom_call.1} parent=11 // pred_region
          %s187 = ssub.s32 2048, 2048
          %188 = vsyncadd [#allocation8], %s187
          %s189 = sshll.u32 [#allocation7], 4
          %s190 = int_to_ptr.vmem [resolvable:$true] %s189
          %195 = dma.hbm_to_vmem [thread:$0]  %s1, 2048, %s190, [#allocation8], 128, 128, 8
        $region16: #{tpu_custom_call.1} parent=11 // pred_fallthru
          _
        // Predicated region
        $region17: #{tpu_custom_call.1} parent=11 // pred_check
          %p196 = pneg %p100
        $region18: #{tpu_custom_call.1} parent=11 // pred_check_branch
          %198 = sbr.rel (%p196) target = $region20
        $region19: #{tpu_custom_call.1} parent=11 // pred_region
          _
        $region20: #{tpu_custom_call.1} parent=11 // pred_fallthru
          _
        // Predicated region
        $region21: #{tpu_custom_call.1} parent=11 // pred_check
          %p199 = pneg %p121
        $region22: #{tpu_custom_call.1} parent=11 // pred_check_branch
          %201 = sbr.rel (%p199) target = $region24
        $region23: #{tpu_custom_call.1} parent=11 // pred_region
          %s203 = ssub.s32 2048, 2048
          %204 = vsyncadd [#allocation8], %s203
          %s205 = sshll.u32 [#allocation9], 4
          %s206 = int_to_ptr.vmem [resolvable:$true] %s205
          %211 = dma.hbm_to_vmem [thread:$0]  %s3, 2048, %s206, [#allocation8], 64, 64, 4
        $region24: #{tpu_custom_call.1} parent=11 // pred_fallthru
          _
        // Predicated region
        $region25: #{tpu_custom_call.1} parent=11 // pred_check
          %p212 = pneg %p142
        $region26: #{tpu_custom_call.1} parent=11 // pred_check_branch
          %214 = sbr.rel (%p212) target = $region28
        $region27: #{tpu_custom_call.1} parent=11 // pred_region
          _
        $region28: #{tpu_custom_call.1} parent=11 // pred_fallthru
          _
      $region12: #{tpu_custom_call.1} parent=5 // pred_fallthru
        _
      %p215 = scmp.lt.s32.totalorder %s18, 8
      // Predicated region
      $region29: #{tpu_custom_call.1} parent=5 // pred_check
        %p216 = pneg %p215
      $region30: #{tpu_custom_call.1} parent=5 // pred_check_branch
        %218 = sbr.rel (%p216) target = $region32
      $region31: #{tpu_custom_call.1} parent=5 // pred_region
        // Predicated region
        $region33: #{tpu_custom_call.1} parent=31 // pred_check
          %p219 = pneg %p52
        $region34: #{tpu_custom_call.1} parent=31 // pred_check_branch
          %221 = sbr.rel (%p219) target = $region36
        $region35: #{tpu_custom_call.1} parent=31 // pred_region
          %s222 = sand.u32 %s42, 1
          %s223 = scalar_lea.sflag [#allocation5], %s222
          %s224 = sand.u32 %s42, 1
          %s225 = smul.addr %s224, 32
          %s226 = scalar_lea.vmem [#allocation4], %s225
          %s227 = smul.u32 4, %s26
          %s229 = ssub.s32 512, 512
          %230 = vsyncadd %s223, %s229
          %s231 = smul.addr %s25, 16
          %s232 = sadd.s32 %s227, %s231
          %s233 = smul.addr %s232, 128
          %s234 = scalar_lea.hbm %s0, %s233
          %s235 = sshll.u32 %s226, 4
          %s236 = int_to_ptr.vmem [resolvable:$true] %s235
          %241 = dma.hbm_to_vmem [thread:$0]  %s234, 512, %s236, %s223, 128, 128, 8
        $region36: #{tpu_custom_call.1} parent=31 // pred_fallthru
          _
      $region32: #{tpu_custom_call.1} parent=5 // pred_fallthru
        _
      %p242 = scmp.le.s32.totalorder 1, %s18
      %p243 = scmp.lt.s32.totalorder %s18, 9
      %p244 = pnand %p242, %p243
      %p245 = pneg %p244
      // Predicated region
      $region37: #{tpu_custom_call.1} parent=5 // pred_check
        _
      $region38: #{tpu_custom_call.1} parent=5 // pred_check_branch
        %247 = sbr.rel (%p244) target = $region40
      $region39: #{tpu_custom_call.1} parent=5 // pred_region
        %s248 = ssub.s32 %s18, 1
        %s249 = sand.u32 %s45, 1
        %s250 = scalar_lea.sflag [#allocation5], %s249
        %s251 = sand.u32 %s45, 1
        %s252 = smul.addr %s251, 32
        %s253 = scalar_lea.vmem [#allocation4], %s252
        // Predicated region
        $region41: #{tpu_custom_call.1} parent=39 // pred_check
          %p254 = pneg %p58
        $region42: #{tpu_custom_call.1} parent=39 // pred_check_branch
          %256 = sbr.rel (%p254) target = $region44
        $region43: #{tpu_custom_call.1} parent=39 // pred_region
          %257 = dma.done %s250, 512
        $region44: #{tpu_custom_call.1} parent=39 // pred_fallthru
          _
        // Predicated region
        $region45: #{tpu_custom_call.1} parent=39 // pred_check
          %p258 = pneg %p79
        $region46: #{tpu_custom_call.1} parent=39 // pred_check_branch
          %260 = sbr.rel (%p258) target = $region48
        $region47: #{tpu_custom_call.1} parent=39 // pred_region
          %261 = dma.done [#allocation8], 2048
        $region48: #{tpu_custom_call.1} parent=39 // pred_fallthru
          _
        // Predicated region
        $region49: #{tpu_custom_call.1} parent=39 // pred_check
          %p262 = pneg %p121
        $region50: #{tpu_custom_call.1} parent=39 // pred_check_branch
          %264 = sbr.rel (%p262) target = $region52
        $region51: #{tpu_custom_call.1} parent=39 // pred_region
          %265 = dma.done [#allocation8], 2048
        $region52: #{tpu_custom_call.1} parent=39 // pred_fallthru
          _
        %s266 = sand.u32 %s45, 1
        %s267 = scalar_lea.sflag [#allocation5], %s266
        %s268 = sand.u32 %s45, 1
        %s269 = smul.addr %s268, 32
        %s270 = scalar_lea.vmem [#allocation4], %s269
        %p271 = pneg %p58
        %p272 = pneg %p55
        %p273 = pneg %p79
        %p274 = pneg %p76
        %p275 = pneg %p100
        %p276 = pneg %p97
        %p277 = pneg %p121
        %p278 = pneg %p118
        %p279 = pneg %p142
        %p280 = pneg %p139
        %p281 = pneg %p168
        %p282 = pneg %p165
        %s283 = sand.u32 %s155, 1
        %s284 = scalar_lea.sflag [#allocation6], %s283
        %s285 = sand.u32 %s155, 1
        %s286 = smul.addr %s285, 128
        %s287 = scalar_lea.vmem [#allocation10], %s286
        %s288 = smul.u32 4, %s28
        %p290 = scmp.eq.s32.totalorder %s28, 0
        // Predicated region
        $region53: #{tpu_custom_call.1} parent=39 // pred_check
          %p291 = pneg %p290
        $region54: #{tpu_custom_call.1} parent=39 // pred_check_branch
          %293 = sbr.rel (%p291) target = $region56
        $region55: #{tpu_custom_call.1} parent=39 // pred_region
          %294 = vst [vmem:[#allocation2] sm:$0x1] 0.0
          %295 = vst [vmem:[#allocation3] sm:$0x1] 0.0
        $region56: #{tpu_custom_call.1} parent=39 // pred_fallthru
          _
        %v296 = vld [vmem:[%s253] sm:$0xff]
        %v297 = vld [vmem:[%s253 + $0x8] sm:$0xff]
        %v298 = vld [vmem:[%s253 + $0x10] sm:$0xff]
        %v299 = vld [vmem:[%s253 + $0x18] sm:$0xff]
        %v300 = vpack.c.bf16 %v297, %v296
        %v301 = vpack.c.bf16 %v299, %v298
        %v302 = vld [vmem:[#allocation7] sm:$0xff]
        %v303 = vld [vmem:[#allocation7 + $0x8] sm:$0xff]
        %v304 = vld [vmem:[#allocation7 + $0x10] sm:$0xff]
        %v305 = vld [vmem:[#allocation7 + $0x18] sm:$0xff]
        %v306 = vld [vmem:[#allocation7 + $0x20] sm:$0xff]
        %v307 = vld [vmem:[#allocation7 + $0x28] sm:$0xff]
        %v308 = vld [vmem:[#allocation7 + $0x30] sm:$0xff]
        %v309 = vld [vmem:[#allocation7 + $0x38] sm:$0xff]
        %v310 = vld [vmem:[#allocation7 + $0x40] sm:$0xff]
        %v311 = vld [vmem:[#allocation7 + $0x48] sm:$0xff]
        %v312 = vld [vmem:[#allocation7 + $0x50] sm:$0xff]
        %v313 = vld [vmem:[#allocation7 + $0x58] sm:$0xff]
        %v314 = vld [vmem:[#allocation7 + $0x60] sm:$0xff]
        %v315 = vld [vmem:[#allocation7 + $0x68] sm:$0xff]
        %v316 = vld [vmem:[#allocation7 + $0x70] sm:$0xff]
        %v317 = vld [vmem:[#allocation7 + $0x78] sm:$0xff]
        %v318 = vld [vmem:[%s2] sm:$0x3]
        %v320 = vlaneseq
        %v321 = vshrl.u32 %v320, 7
        %v322 = vsub.s32 0, %v321
        %v323 = vrot.slane %v318, %v322
        %v324 = vlaneseq
        %v325 = vshrl.u32 %v324, 7
        %v326 = vsub.s32 1, %v325
        %v327 = vrot.slane %v318, %v326
        %v346 = vunpack.c.l.b16 %v302
        %v347 = vunpack.c.h.b16 %v302
        %v348 = vunpack.c.l.b16 %v303
        %v349 = vunpack.c.h.b16 %v303
        %v350 = vunpack.c.l.b16 %v304
        %v351 = vunpack.c.h.b16 %v304
        %v352 = vunpack.c.l.b16 %v305
        %v353 = vunpack.c.h.b16 %v305
        %v354 = vunpack.c.l.b16 %v306
        %v355 = vunpack.c.h.b16 %v306
        %v356 = vunpack.c.l.b16 %v307
        %v357 = vunpack.c.h.b16 %v307
        %v358 = vunpack.c.l.b16 %v308
        %v359 = vunpack.c.h.b16 %v308
        %v360 = vunpack.c.l.b16 %v309
        %v361 = vunpack.c.h.b16 %v309
        %v362 = vunpack.c.l.b16 %v310
        %v363 = vunpack.c.h.b16 %v310
        %v364 = vunpack.c.l.b16 %v311
        %v365 = vunpack.c.h.b16 %v311
        %v366 = vunpack.c.l.b16 %v312
        %v367 = vunpack.c.h.b16 %v312
        %v368 = vunpack.c.l.b16 %v313
        %v369 = vunpack.c.h.b16 %v313
        %v370 = vunpack.c.l.b16 %v314
        %v371 = vunpack.c.h.b16 %v314
        %v372 = vunpack.c.l.b16 %v315
        %v373 = vunpack.c.h.b16 %v315
        %v374 = vunpack.c.l.b16 %v316
        %v375 = vunpack.c.h.b16 %v316
        %v376 = vunpack.c.l.b16 %v317
        %v377 = vunpack.c.h.b16 %v317
        %v378 = vpack.c.b16 %v348, %v346
        %v379 = vpack.c.b16 %v349, %v347
        %v380 = vpack.c.b16 %v352, %v350
        %v381 = vpack.c.b16 %v353, %v351
        %v382 = vpack.c.b16 %v356, %v354
        %v383 = vpack.c.b16 %v357, %v355
        %v384 = vpack.c.b16 %v360, %v358
        %v385 = vpack.c.b16 %v361, %v359
        %v386 = vpack.c.b16 %v364, %v362
        %v387 = vpack.c.b16 %v365, %v363
        %v388 = vpack.c.b16 %v368, %v366
        %v389 = vpack.c.b16 %v369, %v367
        %v390 = vpack.c.b16 %v372, %v370
        %v391 = vpack.c.b16 %v373, %v371
        %v392 = vpack.c.b16 %v376, %v374
        %v393 = vpack.c.b16 %v377, %v375
        %410 = vmatprep.subr.bf16.mxu0 %v393
        %411 = vmatpush1.bf16.msra.mxu0 %v392
        %412 = vmatprep.subr.bf16.mxu0 %v391
        %413 = vmatpush1.bf16.msra.mxu0 %v390
        %414 = vmatprep.subr.bf16.mxu0 %v389
        %415 = vmatpush1.bf16.msra.mxu0 %v388
        %416 = vmatprep.subr.bf16.mxu0 %v387
        %417 = vmatpush1.bf16.msra.mxu0 %v386
        %418 = vmatprep.subr.bf16.mxu0 %v385
        %419 = vmatpush1.bf16.msra.mxu0 %v384
        %420 = vmatprep.subr.bf16.mxu0 %v383
        %421 = vmatpush1.bf16.msra.mxu0 %v382
        %422 = vmatprep.subr.bf16.mxu0 %v381
        %423 = vmatpush1.bf16.msra.mxu0 %v380
        %424 = vmatprep.subr.bf16.mxu0 %v379
        %425 = vmatpush1.bf16.msra.mxu0 %v378
        %426 = vmatprep.subr.bf16.mxu0 0
        %427 = vmatpush2.bf16.msra.mxu0 0
        %428 = vmatprep.subr.bf16.mxu0 0
        %429 = vmatpush2.bf16.msra.mxu0 0
        %430 = vmatprep.subr.bf16.mxu0 0
        %431 = vmatpush2.bf16.msra.mxu0 0
        %432 = vmatprep.subr.bf16.mxu0 0
        %433 = vmatpush2.bf16.msra.mxu0 0
        %434 = vmatprep.subr.bf16.mxu0 0
        %435 = vmatpush2.bf16.msra.mxu0 0
        %436 = vmatprep.subr.bf16.mxu0 0
        %437 = vmatpush2.bf16.msra.mxu0 0
        %438 = vmatprep.subr.bf16.mxu0 0
        %439 = vmatpush2.bf16.msra.mxu0 0
        %440 = vmatprep.subr.bf16.mxu0 0
        %441 = vmatpush2.bf16.msra.mxu0 0
        %442 = vmatprep.mubr.bf16.mxu0 0
        %443 = vmatmul.mubr.bf16.gmra.mxu0 %v300
        %v444 = vpop.f32.mrf.mxu0
        %v445 = vadd.f32 %v323, %v444
        %v446 = vpop.f32.mrf.mxu0
        %v447 = vadd.f32 %v327, %v446
        %v448 = vpop.f32.mrf.mxu0
        %v449 = vadd.f32 %v323, %v448
        %v450 = vpop.f32.mrf.mxu0
        %v451 = vadd.f32 %v327, %v450
        %452 = vmatprep.mubr.bf16.mxu0 0
        %453 = vmatmul.mubr.bf16.gmra.mxu0 %v301
        %v454 = vpop.f32.mrf.mxu0
        %v455 = vadd.f32 %v323, %v454
        %v456 = vpop.f32.mrf.mxu0
        %v457 = vadd.f32 %v327, %v456
        %v458 = vpop.f32.mrf.mxu0
        %v459 = vadd.f32 %v323, %v458
        %v460 = vpop.f32.mrf.mxu0
        %v461 = vadd.f32 %v327, %v460
        %462 = vdwg.mxu0
        %v463 = vmax.f32 %v445, 0.0
        %v464 = vmax.f32 %v447, 0.0
        %v465 = vmax.f32 %v449, 0.0
        %v466 = vmax.f32 %v451, 0.0
        %v467 = vmax.f32 %v455, 0.0
        %v468 = vmax.f32 %v457, 0.0
        %v469 = vmax.f32 %v459, 0.0
        %v470 = vmax.f32 %v461, 0.0
        %v471 = vpack.c.bf16 %v465, %v463
        %v472 = vpack.c.bf16 %v466, %v464
        %v473 = vpack.c.bf16 %v469, %v467
        %v474 = vpack.c.bf16 %v470, %v468
        %v475 = vld [vmem:[#allocation9] sm:$0xf]
        %v476 = vld [vmem:[#allocation9 + $0x4] sm:$0xf]
        %v477 = vld [vmem:[#allocation9 + $0x8] sm:$0xf]
        %v478 = vld [vmem:[#allocation9 + $0xc] sm:$0xf]
        %v479 = vld [vmem:[#allocation9 + $0x10] sm:$0xf]
        %v480 = vld [vmem:[#allocation9 + $0x14] sm:$0xf]
        %v481 = vld [vmem:[#allocation9 + $0x18] sm:$0xf]
        %v482 = vld [vmem:[#allocation9 + $0x1c] sm:$0xf]
        %v483 = vld [vmem:[#allocation9 + $0x20] sm:$0xf]
        %v484 = vld [vmem:[#allocation9 + $0x24] sm:$0xf]
        %v485 = vld [vmem:[#allocation9 + $0x28] sm:$0xf]
        %v486 = vld [vmem:[#allocation9 + $0x2c] sm:$0xf]
        %v487 = vld [vmem:[#allocation9 + $0x30] sm:$0xf]
        %v488 = vld [vmem:[#allocation9 + $0x34] sm:$0xf]
        %v489 = vld [vmem:[#allocation9 + $0x38] sm:$0xf]
        %v490 = vld [vmem:[#allocation9 + $0x3c] sm:$0xf]
        %v491 = vld [vmem:[#allocation9 + $0x40] sm:$0xf]
        %v492 = vld [vmem:[#allocation9 + $0x44] sm:$0xf]
        %v493 = vld [vmem:[#allocation9 + $0x48] sm:$0xf]
        %v494 = vld [vmem:[#allocation9 + $0x4c] sm:$0xf]
        %v495 = vld [vmem:[#allocation9 + $0x50] sm:$0xf]
        %v496 = vld [vmem:[#allocation9 + $0x54] sm:$0xf]
        %v497 = vld [vmem:[#allocation9 + $0x58] sm:$0xf]
        %v498 = vld [vmem:[#allocation9 + $0x5c] sm:$0xf]
        %v499 = vld [vmem:[#allocation9 + $0x60] sm:$0xf]
        %v500 = vld [vmem:[#allocation9 + $0x64] sm:$0xf]
        %v501 = vld [vmem:[#allocation9 + $0x68] sm:$0xf]
        %v502 = vld [vmem:[#allocation9 + $0x6c] sm:$0xf]
        %v503 = vld [vmem:[#allocation9 + $0x70] sm:$0xf]
        %v504 = vld [vmem:[#allocation9 + $0x74] sm:$0xf]
        %v505 = vld [vmem:[#allocation9 + $0x78] sm:$0xf]
        %v506 = vld [vmem:[#allocation9 + $0x7c] sm:$0xf]
        %v507 = vld [vmem:[%s4] sm:$0x1]
        %v509 = vlaneseq
        %v510 = vshrl.u32 %v509, 7
        %v511 = vsub.s32 0, %v510
        %v512 = vrot.slane %v507, %v511
        %v546 = vunpack.c.l.b16 %v475
        %v547 = vunpack.c.l.b16 %v476
        %v548 = vunpack.c.l.b16 %v477
        %v549 = vunpack.c.l.b16 %v478
        %v550 = vunpack.c.l.b16 %v479
        %v551 = vunpack.c.l.b16 %v480
        %v552 = vunpack.c.l.b16 %v481
        %v553 = vunpack.c.l.b16 %v482
        %v554 = vunpack.c.l.b16 %v483
        %v555 = vunpack.c.l.b16 %v484
        %v556 = vunpack.c.l.b16 %v485
        %v557 = vunpack.c.l.b16 %v486
        %v558 = vunpack.c.l.b16 %v487
        %v559 = vunpack.c.l.b16 %v488
        %v560 = vunpack.c.l.b16 %v489
        %v561 = vunpack.c.l.b16 %v490
        %v562 = vunpack.c.l.b16 %v491
        %v563 = vunpack.c.l.b16 %v492
        %v564 = vunpack.c.l.b16 %v493
        %v565 = vunpack.c.l.b16 %v494
        %v566 = vunpack.c.l.b16 %v495
        %v567 = vunpack.c.l.b16 %v496
        %v568 = vunpack.c.l.b16 %v497
        %v569 = vunpack.c.l.b16 %v498
        %v570 = vunpack.c.l.b16 %v499
        %v571 = vunpack.c.l.b16 %v500
        %v572 = vunpack.c.l.b16 %v501
        %v573 = vunpack.c.l.b16 %v502
        %v574 = vunpack.c.l.b16 %v503
        %v575 = vunpack.c.l.b16 %v504
        %v576 = vunpack.c.l.b16 %v505
        %v577 = vunpack.c.l.b16 %v506
        %v578 = vpack.c.b16 %v547, %v546
        %v579 = vpack.c.b16 %v549, %v548
        %v580 = vpack.c.b16 %v551, %v550
        %v581 = vpack.c.b16 %v553, %v552
        %v582 = vpack.c.b16 %v555, %v554
        %v583 = vpack.c.b16 %v557, %v556
        %v584 = vpack.c.b16 %v559, %v558
        %v585 = vpack.c.b16 %v561, %v560
        %v586 = vpack.c.b16 %v563, %v562
        %v587 = vpack.c.b16 %v565, %v564
        %v588 = vpack.c.b16 %v567, %v566
        %v589 = vpack.c.b16 %v569, %v568
        %v590 = vpack.c.b16 %v571, %v570
        %v591 = vpack.c.b16 %v573, %v572
        %v592 = vpack.c.b16 %v575, %v574
        %v593 = vpack.c.b16 %v577, %v576
        %610 = vmatprep.subr.bf16.mxu0 0
        %611 = vmatpush1.bf16.msra.mxu0 %v585
        %612 = vmatprep.subr.bf16.mxu0 0
        %613 = vmatpush1.bf16.msra.mxu0 %v584
        %614 = vmatprep.subr.bf16.mxu0 0
        %615 = vmatpush1.bf16.msra.mxu0 %v583
        %616 = vmatprep.subr.bf16.mxu0 0
        %617 = vmatpush1.bf16.msra.mxu0 %v582
        %618 = vmatprep.subr.bf16.mxu0 0
        %619 = vmatpush1.bf16.msra.mxu0 %v581
        %620 = vmatprep.subr.bf16.mxu0 0
        %621 = vmatpush1.bf16.msra.mxu0 %v580
        %622 = vmatprep.subr.bf16.mxu0 0
        %623 = vmatpush1.bf16.msra.mxu0 %v579
        %624 = vmatprep.subr.bf16.mxu0 0
        %625 = vmatpush1.bf16.msra.mxu0 %v578
        %626 = vmatprep.subr.bf16.mxu0 0
        %627 = vmatpush2.bf16.msra.mxu0 %v593
        %628 = vmatprep.subr.bf16.mxu0 0
        %629 = vmatpush2.bf16.msra.mxu0 %v592
        %630 = vmatprep.subr.bf16.mxu0 0
        %631 = vmatpush2.bf16.msra.mxu0 %v591
        %632 = vmatprep.subr.bf16.mxu0 0
        %633 = vmatpush2.bf16.msra.mxu0 %v590
        %634 = vmatprep.subr.bf16.mxu0 0
        %635 = vmatpush2.bf16.msra.mxu0 %v589
        %636 = vmatprep.subr.bf16.mxu0 0
        %637 = vmatpush2.bf16.msra.mxu0 %v588
        %638 = vmatprep.subr.bf16.mxu0 0
        %639 = vmatpush2.bf16.msra.mxu0 %v587
        %640 = vmatprep.subr.bf16.mxu0 0
        %641 = vmatpush2.bf16.msra.mxu0 %v586
        %642 = vmatprep.mubr.bf16.mxu0 %v472
        %643 = vmatmul.mubr.bf16.gmra.mxu0 %v471
        %v644 = vpop.f32.mrf.mxu0
        %v645 = vadd.f32 %v512, %v644
        %v646 = vpop.f32.mrf.mxu0
        %v647 = vpop.f32.mrf.mxu0
        %v648 = vadd.f32 %v512, %v647
        %v649 = vpop.f32.mrf.mxu0
        %650 = vmatprep.mubr.bf16.mxu0 %v474
        %651 = vmatmul.mubr.bf16.gmra.mxu0 %v473
        %v652 = vpop.f32.mrf.mxu0
        %v653 = vadd.f32 %v512, %v652
        %v654 = vpop.f32.mrf.mxu0
        %v655 = vpop.f32.mrf.mxu0
        %v656 = vadd.f32 %v512, %v655
        %v657 = vpop.f32.mrf.mxu0
        %658 = vdwg.mxu0
        %v659 = vadd.f32 %v645, %v296
        %v660 = vadd.f32 %v648, %v297
        %v661 = vadd.f32 %v653, %v298
        %v662 = vadd.f32 %v656, %v299
        %v663 = vld [vmem:[#allocation2] sm:$0x1]
        %v664 = vadd.f32 %v659, %v660
        %v665 = vadd.f32 %v664, %v661
        %v666 = vadd.f32 %v665, %v662
        %v667 = vrot.slane %v666, 4
        %v668 = vadd.f32 %v666, %v667
        %v669 = vrot.slane %v668, 2
        %v670 = vadd.f32 %v668, %v669
        %v671 = vrot.slane %v670, 1
        %v672 = vadd.f32 %v670, %v671
        %v673 = vadd.f32 %v663, %v672
        %674 = vst [vmem:[#allocation2] sm:$0x1] %v673
        %v675 = vld [vmem:[#allocation3] sm:$0x1]
        %v676 = vmul.f32 %v659, %v659
        %v677 = vmul.f32 %v660, %v660
        %v678 = vmul.f32 %v661, %v661
        %v679 = vmul.f32 %v662, %v662
        %v680 = vadd.f32 %v676, %v677
        %v681 = vadd.f32 %v680, %v678
        %v682 = vadd.f32 %v681, %v679
        %v683 = vrot.slane %v682, 4
        %v684 = vadd.f32 %v682, %v683
        %v685 = vrot.slane %v684, 2
        %v686 = vadd.f32 %v684, %v685
        %v687 = vrot.slane %v686, 1
        %v688 = vadd.f32 %v686, %v687
        %v689 = vadd.f32 %v675, %v688
        %690 = vst [vmem:[#allocation3] sm:$0x1] %v689
        %s691 = smul.u32 %s28, 32
        %s692 = scalar_lea.vmem %s287, %s691 [#allocation10]
        %693 = vst [vmem:[%s692] sm:$0xff] %v659
        %694 = vst [vmem:[%s692 + $0x8] sm:$0xff] %v660
        %695 = vst [vmem:[%s692 + $0x10] sm:$0xff] %v661
        %696 = vst [vmem:[%s692 + $0x18] sm:$0xff] %v662
        %p697 = scmp.eq.s32.totalorder %s28, 3
        // Predicated region
        $region57: #{tpu_custom_call.1} parent=39 // pred_check
          %p698 = pneg %p697
        $region58: #{tpu_custom_call.1} parent=39 // pred_check_branch
          %700 = sbr.rel (%p698) target = $region60
        $region59: #{tpu_custom_call.1} parent=39 // pred_region
          %v701 = vld [vmem:[#allocation2] sm:$0x1]
          %vm702 = vcmask 1040384
          %v703 = vsel %vm702, %v701, 0.0
          %704 = vadd.xlane.f32.xlu0 %v703
          %v705 = vpop.xlane.xlu0 %704
          %v706 = vld [vmem:[#allocation3] sm:$0x1]
          %v707 = vsel %vm702, %v706, 0.0
          %708 = vadd.xlane.f32.xlu0 %v707
          %v709 = vpop.xlane.xlu0 %708
          %v710 = vrcp.pop 16384.0
          %v711 = vmul.f32 %v705, %v710
          %v712 = vmul.f32 %v711, 16384.0
          %v713 = vmul.f32 %v712, %v711
          %v714 = vsub.f32 %v709, %v713
          %v715 = vrcp.pop 16383.0
          %v716 = vmul.f32 %v714, %v715
          %v717 = vadd.f32 %v716, 1e-05
          %v718 = vrsqrt.pop %v717
          %v719 = vld [vmem:[%s287] sm:$0xff]
          %v720 = vld [vmem:[%s287 + $0x8] sm:$0xff]
          %v721 = vld [vmem:[%s287 + $0x10] sm:$0xff]
          %v722 = vld [vmem:[%s287 + $0x18] sm:$0xff]
          %v723 = vld [vmem:[%s287 + $0x20] sm:$0xff]
          %v724 = vld [vmem:[%s287 + $0x28] sm:$0xff]
          %v725 = vld [vmem:[%s287 + $0x30] sm:$0xff]
          %v726 = vld [vmem:[%s287 + $0x38] sm:$0xff]
          %v727 = vld [vmem:[%s287 + $0x40] sm:$0xff]
          %v728 = vld [vmem:[%s287 + $0x48] sm:$0xff]
          %v729 = vld [vmem:[%s287 + $0x50] sm:$0xff]
          %v730 = vld [vmem:[%s287 + $0x58] sm:$0xff]
          %v731 = vld [vmem:[%s287 + $0x60] sm:$0xff]
          %v732 = vld [vmem:[%s287 + $0x68] sm:$0xff]
          %v733 = vld [vmem:[%s287 + $0x70] sm:$0xff]
          %v734 = vld [vmem:[%s287 + $0x78] sm:$0xff]
          %v735 = vlaneseq
          %v736 = vshrl.u32 %v735, 7
          %v737 = vsub.s32 0, %v736
          %v738 = vrot.slane %v711, %v737
          %v739 = vsub.f32 %v719, %v738
          %v740 = vsub.f32 %v720, %v738
          %v741 = vsub.f32 %v721, %v738
          %v742 = vsub.f32 %v722, %v738
          %v743 = vsub.f32 %v723, %v738
          %v744 = vsub.f32 %v724, %v738
          %v745 = vsub.f32 %v725, %v738
          %v746 = vsub.f32 %v726, %v738
          %v747 = vsub.f32 %v727, %v738
          %v748 = vsub.f32 %v728, %v738
          %v749 = vsub.f32 %v729, %v738
          %v750 = vsub.f32 %v730, %v738
          %v751 = vsub.f32 %v731, %v738
          %v752 = vsub.f32 %v732, %v738
          %v753 = vsub.f32 %v733, %v738
          %v754 = vsub.f32 %v734, %v738
          %v755 = vlaneseq
          %v756 = vshrl.u32 %v755, 7
          %v757 = vsub.s32 0, %v756
          %v758 = vrot.slane %v718, %v757
          %v759 = vmul.f32 %v739, %v758
          %v760 = vmul.f32 %v740, %v758
          %v761 = vmul.f32 %v741, %v758
          %v762 = vmul.f32 %v742, %v758
          %v763 = vmul.f32 %v743, %v758
          %v764 = vmul.f32 %v744, %v758
          %v765 = vmul.f32 %v745, %v758
          %v766 = vmul.f32 %v746, %v758
          %v767 = vmul.f32 %v747, %v758
          %v768 = vmul.f32 %v748, %v758
          %v769 = vmul.f32 %v749, %v758
          %v770 = vmul.f32 %v750, %v758
          %v771 = vmul.f32 %v751, %v758
          %v772 = vmul.f32 %v752, %v758
          %v773 = vmul.f32 %v753, %v758
          %v774 = vmul.f32 %v754, %v758
          %775 = vst [vmem:[%s287] sm:$0xff] %v759
          %776 = vst [vmem:[%s287 + $0x8] sm:$0xff] %v760
          %777 = vst [vmem:[%s287 + $0x10] sm:$0xff] %v761
          %778 = vst [vmem:[%s287 + $0x18] sm:$0xff] %v762
          %779 = vst [vmem:[%s287 + $0x20] sm:$0xff] %v763
          %780 = vst [vmem:[%s287 + $0x28] sm:$0xff] %v764
          %781 = vst [vmem:[%s287 + $0x30] sm:$0xff] %v765
          %782 = vst [vmem:[%s287 + $0x38] sm:$0xff] %v766
          %783 = vst [vmem:[%s287 + $0x40] sm:$0xff] %v767
          %784 = vst [vmem:[%s287 + $0x48] sm:$0xff] %v768
          %785 = vst [vmem:[%s287 + $0x50] sm:$0xff] %v769
          %786 = vst [vmem:[%s287 + $0x58] sm:$0xff] %v770
          %787 = vst [vmem:[%s287 + $0x60] sm:$0xff] %v771
          %788 = vst [vmem:[%s287 + $0x68] sm:$0xff] %v772
          %789 = vst [vmem:[%s287 + $0x70] sm:$0xff] %v773
          %790 = vst [vmem:[%s287 + $0x78] sm:$0xff] %v774
        $region60: #{tpu_custom_call.1} parent=39 // pred_fallthru
          _
        %s791 = sand.u32 %s155, 1
        %s792 = scalar_lea.sflag [#allocation6], %s791
        %s793 = sand.u32 %s155, 1
        %s794 = smul.addr %s793, 128
        %s795 = scalar_lea.vmem [#allocation10], %s794
        // Predicated region
        $region61: #{tpu_custom_call.1} parent=39 // pred_check
          %p796 = pneg %p165
        $region62: #{tpu_custom_call.1} parent=39 // pred_check_branch
          %798 = sbr.rel (%p796) target = $region64
        $region63: #{tpu_custom_call.1} parent=39 // pred_region
          %s800 = ssub.s32 2048, 2048
          %801 = vsyncadd %s792, %s800
          %s802 = smul.addr %s27, 16
          %s803 = smul.addr %s802, 128
          %s804 = scalar_lea.hbm %s5, %s803
          %s805 = sshll.u32 %s795, 4
          %s806 = int_to_ptr.vmem [resolvable:$true] %s805
          %811 = dma.vmem_to_hbm [thread:$0]  %s806, 2048, %s804, %s792, 128, 128, 8
        $region64: #{tpu_custom_call.1} parent=39 // pred_fallthru
          _
      $region40: #{tpu_custom_call.1} parent=5 // pred_fallthru
        _
      %p812 = scmp.le.s32.totalorder 2, %s18
      // Predicated region
      $region65: #{tpu_custom_call.1} parent=5 // pred_check
        %p813 = pneg %p812
      $region66: #{tpu_custom_call.1} parent=5 // pred_check_branch
        %815 = sbr.rel (%p813) target = $region68
      $region67: #{tpu_custom_call.1} parent=5 // pred_region
        %s816 = ssub.s32 %s18, 2
        // Predicated region
        $region69: #{tpu_custom_call.1} parent=67 // pred_check
          %p817 = pneg %p171
        $region70: #{tpu_custom_call.1} parent=67 // pred_check_branch
          %819 = sbr.rel (%p817) target = $region72
        $region71: #{tpu_custom_call.1} parent=67 // pred_region
          %s820 = sand.u32 %s156, 1
          %s821 = scalar_lea.sflag [#allocation6], %s820
          %s822 = sand.u32 %s156, 1
          %s823 = smul.addr %s822, 128
          %s824 = scalar_lea.vmem [#allocation10], %s823
          %825 = dma.done %s821, 2048
        $region72: #{tpu_custom_call.1} parent=67 // pred_fallthru
          _
      $region68: #{tpu_custom_call.1} parent=5 // pred_fallthru
        _
    $region6: #{tpu_custom_call.1} parent=1 // loop_footer
      %s22 = sadd.s32 1, %s18
    $region7: #{tpu_custom_call.1} parent=1 // loop_footer_branch
      %17 = sbr.rel target = $region3
    $region8: #{tpu_custom_call.1} parent=1 // loop_exit
      _
    %826 = vsyncpa [#allocation5], 1
    %s827 = scalar_lea.sflag [#allocation5], 1
    %828 = vsyncpa %s827, 1
    %829 = vsyncpa [#allocation8], 1
    %830 = vsyncpa [#allocation6], 1
    %s831 = scalar_lea.sflag [#allocation6], 1
    %832 = vsyncpa %s831, 1

// kernel: tpu_custom_call.1
$region0: #{tpu_custom_call.1}
  #allocation0 [shape = 'u32[]', space=smem, size = 0x4, offset = 0x4, fixed_abs, tag = 'smem constant byte address 0x4 - core index']
  #allocation1 [shape = 'u32[144,128]{1,0:T(1,128)}', space=vmem, size = 0x12000, scoped, tag = 'internal scratch']
  #allocation2 [shape = 'f32[1,128]{1,0:T(1,128)}', space=vmem, size = 0x200, scoped, tag = 'scratch operand']
  #allocation3 [shape = 'f32[1,128]{1,0:T(1,128)}', space=vmem, size = 0x200, scoped, tag = 'scratch operand']
  %s0 = inlined_call_operand.hbm [shape: f32[2,128,128], index: 0, kind: input, shape index: {}]
  %s1 = inlined_call_operand.hbm [shape: bf16[128,256], index: 1, kind: input, shape index: {}]
  %s2 = inlined_call_operand.vmem [shape: f32[1,256], index: 2, kind: input, shape index: {}]
  %s3 = inlined_call_operand.hbm [shape: bf16[256,128], index: 3, kind: input, shape index: {}]
  %s4 = inlined_call_operand.vmem [shape: f32[1,128], index: 4, kind: input, shape index: {}]
  %s5 = inlined_call_operand.hbm [shape: f32[2,128,128], index: 5, kind: output, shape index: {}]
  %s6 = sld [smem:[#allocation0]]
  $region73: #{tpu_custom_call.1} parent=0
    _
  %s8 = ssub.s32 1, %s6
  %s9 = scalar_select 0, %s8, %s6
  $region1: #{tpu_custom_call.1} parent=0
    #allocation4 [shape = 'u8[32768]{0}', space=vmem, size = 0x8000, scoped, tag = 'input window, operand 0']
    #allocation5 [shape = 's32[2]{0}', space=sflag, size = 0x8, scoped, tag = 'scoped memory for tpu_custom_call.1']
    #allocation6 [shape = 's32[2]{0}', space=sflag, size = 0x8, scoped, tag = 'scoped memory for tpu_custom_call.1']
    #allocation7 [shape = 'u8[65536]{0}', space=vmem, size = 0x10000, scoped, tag = 'input window, operand 1, single buffered']
    #allocation8 [shape = 's32[1]{0}', space=sflag, size = 0x4, scoped, tag = 'scoped memory for tpu_custom_call.1']
    #allocation9 [shape = 'u8[65536]{0}', space=vmem, size = 0x10000, scoped, tag = 'input window, operand 3, single buffered']
    #allocation10 [shape = 'u8[131072]{0}', space=vmem, size = 0x20000, scoped, tag = 'output window, operand 0']
    %10 = vsyncpa [#allocation5], 0
    %s11 = scalar_lea.sflag [#allocation5], 1
    %12 = vsyncpa %s11, 0
    %13 = vsyncpa [#allocation8], 0
    %14 = vsyncpa [#allocation6], 0
    %s15 = scalar_lea.sflag [#allocation6], 1
    %16 = vsyncpa %s15, 0
    loop: start=0, step=1, limit=10
    $region2: #{tpu_custom_call.1} parent=1 // loop_pre_header
      _
    $region3: #{tpu_custom_call.1} parent=1 // loop_header
      %s18 = sphi 0, %s22
      %p19 = scmp.ge.s32.totalorder %s18, 10
      %s25 = sphi 0, %s37
      %s26 = sphi 0, %s33
      %s27 = sphi 0, %s25
      %s28 = sphi 0, %s26
      %s29 = sphi 0, %s27
      %s30 = sphi 0, %s28
      %s42 = sphi 0, %s44
      %s45 = sphi 0, %s42
      %s46 = sphi 0, %s45
      %s62 = sphi 0, %s46
      %s66 = sphi 0, %s66
      %s68 = sphi 0, %s66
      %s69 = sphi 0, %s68
      %s83 = sphi 0, %s69
      %s87 = sphi 0, %s87
      %s89 = sphi 0, %s87
      %s90 = sphi 0, %s89
      %s104 = sphi 0, %s90
      %s108 = sphi 0, %s108
      %s110 = sphi 0, %s108
      %s111 = sphi 0, %s110
      %s125 = sphi 0, %s111
      %s129 = sphi 0, %s129
      %s131 = sphi 0, %s129
      %s132 = sphi 0, %s131
      %s146 = sphi 0, %s132
      %s152 = sphi 0, %s154
      %s155 = sphi 0, %s152
      %s156 = sphi 0, %s155
      %s172 = sphi 0, %s156
    $region4: #{tpu_custom_call.1} parent=1 // loop_header_branch
      %21 = sbr.rel (%p19) target = $region8
    $region5: #{tpu_custom_call.1} parent=1 // loop_body
      %s23 = ssub.s32 %s18, 1
      %s24 = ssub.s32 %s18, 2
      %s31 = sadd.s32 1, %s26
      %p32 = scmp.ge.s32.totalorder %s31, 4
      %s33 = scalar_select %p32, 0, %s31
      %s34 = sadd.s32 1, %s25
      %s35 = scalar_select %p32, %s34, %s25
      %p36 = scmp.ge.s32.totalorder %s35, 2
      %s37 = scalar_select %p36, 0, %s35
      %s38 = ssub.s32 %s25, %s37
      %s39 = ssub.s32 %s26, %s33
      %s40 = sor.u32 %s38, %s39
      %p41 = scmp.eq.s32.totalorder %s40, 0
      %s43 = sadd.s32 %s42, 1
      %s44 = scalar_select %p41, %s42, %s43
      %p47 = pneg %p41
      %p48 = scmp.eq.s32.totalorder %s18, 7
      %p49 = por %p47, %p48
      %p50 = scmp.ne.s32.totalorder %s42, %s45
      %p51 = scmp.eq.s32.totalorder %s18, 0
      %p52 = por %p50, %p51
      %p53 = scmp.ne.s32.totalorder %s42, %s45
      %p54 = scmp.eq.s32.totalorder %s23, 7
      %p55 = por %p53, %p54
      %p56 = scmp.ne.s32.totalorder %s45, %s46
      %p57 = scmp.eq.s32.totalorder %s23, 0
      %p58 = por %p56, %p57
      %p59 = scmp.ne.s32.totalorder %s45, %s46
      %p60 = scmp.eq.s32.totalorder %s24, 7
      %p61 = por %p59, %p60
      %p63 = scmp.ne.s32.totalorder %s46, %s62
      %p64 = scmp.eq.s32.totalorder %s24, 0
      %p65 = por %p63, %p64
      %s67 = sadd.s32 %s66, 1
      %p70 = scmp.eq.s32.totalorder %s18, 7
      %p71 = scmp.ne.s32.totalorder %s66, %s68
      %p72 = scmp.eq.s32.totalorder %s18, 0
      %p73 = por %p71, %p72
      %p74 = scmp.ne.s32.totalorder %s66, %s68
      %p75 = scmp.eq.s32.totalorder %s23, 7
      %p76 = por %p74, %p75
      %p77 = scmp.ne.s32.totalorder %s68, %s69
      %p78 = scmp.eq.s32.totalorder %s23, 0
      %p79 = por %p77, %p78
      %p80 = scmp.ne.s32.totalorder %s68, %s69
      %p81 = scmp.eq.s32.totalorder %s24, 7
      %p82 = por %p80, %p81
      %p84 = scmp.ne.s32.totalorder %s69, %s83
      %p85 = scmp.eq.s32.totalorder %s24, 0
      %p86 = por %p84, %p85
      %s88 = sadd.s32 %s87, 1
      %p91 = scmp.eq.s32.totalorder %s18, 7
      %p92 = scmp.ne.s32.totalorder %s87, %s89
      %p93 = scmp.eq.s32.totalorder %s18, 0
      %p94 = por %p92, %p93
      %p95 = scmp.ne.s32.totalorder %s87, %s89
      %p96 = scmp.eq.s32.totalorder %s23, 7
      %p97 = por %p95, %p96
      %p98 = scmp.ne.s32.totalorder %s89, %s90
      %p99 = scmp.eq.s32.totalorder %s23, 0
      %p100 = por %p98, %p99
      %p101 = scmp.ne.s32.totalorder %s89, %s90
      %p102 = scmp.eq.s32.totalorder %s24, 7
      %p103 = por %p101, %p102
      %p105 = scmp.ne.s32.totalorder %s90, %s104
      %p106 = scmp.eq.s32.totalorder %s24, 0
      %p107 = por %p105, %p106
      %s109 = sadd.s32 %s108, 1
      %p112 = scmp.eq.s32.totalorder %s18, 7
      %p113 = scmp.ne.s32.totalorder %s108, %s110
      %p114 = scmp.eq.s32.totalorder %s18, 0
      %p115 = por %p113, %p114
      %p116 = scmp.ne.s32.totalorder %s108, %s110
      %p117 = scmp.eq.s32.totalorder %s23, 7
      %p118 = por %p116, %p117
      %p119 = scmp.ne.s32.totalorder %s110, %s111
      %p120 = scmp.eq.s32.totalorder %s23, 0
      %p121 = por %p119, %p120
      %p122 = scmp.ne.s32.totalorder %s110, %s111
      %p123 = scmp.eq.s32.totalorder %s24, 7
      %p124 = por %p122, %p123
      %p126 = scmp.ne.s32.totalorder %s111, %s125
      %p127 = scmp.eq.s32.totalorder %s24, 0
      %p128 = por %p126, %p127
      %s130 = sadd.s32 %s129, 1
      %p133 = scmp.eq.s32.totalorder %s18, 7
      %p134 = scmp.ne.s32.totalorder %s129, %s131
      %p135 = scmp.eq.s32.totalorder %s18, 0
      %p136 = por %p134, %p135
      %p137 = scmp.ne.s32.totalorder %s129, %s131
      %p138 = scmp.eq.s32.totalorder %s23, 7
      %p139 = por %p137, %p138
      %p140 = scmp.ne.s32.totalorder %s131, %s132
      %p141 = scmp.eq.s32.totalorder %s23, 0
      %p142 = por %p140, %p141
      %p143 = scmp.ne.s32.totalorder %s131, %s132
      %p144 = scmp.eq.s32.totalorder %s24, 7
      %p145 = por %p143, %p144
      %p147 = scmp.ne.s32.totalorder %s132, %s146
      %p148 = scmp.eq.s32.totalorder %s24, 0
      %p149 = por %p147, %p148
      %s150 = ssub.s32 %s25, %s37
      %p151 = scmp.eq.s32.totalorder %s150, 0
      %s153 = sadd.s32 %s152, 1
      %s154 = scalar_select %p151, %s152, %s153
      %p157 = pneg %p151
      %p158 = scmp.eq.s32.totalorder %s18, 7
      %p159 = por %p157, %p158
      %p160 = scmp.ne.s32.totalorder %s152, %s155
      %p161 = scmp.eq.s32.totalorder %s18, 0
      %p162 = por %p160, %p161
      %p163 = scmp.ne.s32.totalorder %s152, %s155
      %p164 = scmp.eq.s32.totalorder %s23, 7
      %p165 = por %p163, %p164
      %p166 = scmp.ne.s32.totalorder %s155, %s156
      %p167 = scmp.eq.s32.totalorder %s23, 0
      %p168 = por %p166, %p167
      %p169 = scmp.ne.s32.totalorder %s155, %s156
      %p170 = scmp.eq.s32.totalorder %s24, 7
      %p171 = por %p169, %p170
      %p173 = scmp.ne.s32.totalorder %s156, %s172
      %p174 = scmp.eq.s32.totalorder %s24, 0
      %p175 = por %p173, %p174
      %p176 = scmp.le.s32.totalorder 1, %s18
      %p177 = scmp.lt.s32.totalorder %s18, 9
      %p178 = pnand %p176, %p177
      %p179 = pneg %p178
      // Predicated region
      $region9: #{tpu_custom_call.1} parent=5 // pred_check
        _
      $region10: #{tpu_custom_call.1} parent=5 // pred_check_branch
        %181 = sbr.rel (%p178) target = $region12
      $region11: #{tpu_custom_call.1} parent=5 // pred_region
        %s182 = ssub.s32 %s18, 1
        // Predicated region
        $region13: #{tpu_custom_call.1} parent=11 // pred_check
          %p183 = pneg %p79
        $region14: #{tpu_custom_call.1} parent=11 // pred_check_branch
          %185 = sbr.rel (%p183) target = $region16
        $region15: #{tpu_custom_call.1} parent=11 // pred_region
          %s187 = ssub.s32 2048, 2048
          %188 = vsyncadd [#allocation8], %s187
          %s189 = sshll.u32 [#allocation7], 4
          %s190 = int_to_ptr.vmem [resolvable:$true] %s189
          %195 = dma.hbm_to_vmem [thread:$0]  %s1, 2048, %s190, [#allocation8], 128, 128, 8
        $region16: #{tpu_custom_call.1} parent=11 // pred_fallthru
          _
        // Predicated region
        $region17: #{tpu_custom_call.1} parent=11 // pred_check
          %p196 = pneg %p100
        $region18: #{tpu_custom_call.1} parent=11 // pred_check_branch
          %198 = sbr.rel (%p196) target = $region20
        $region19: #{tpu_custom_call.1} parent=11 // pred_region
          _
        $region20: #{tpu_custom_call.1} parent=11 // pred_fallthru
          _
        // Predicated region
        $region21: #{tpu_custom_call.1} parent=11 // pred_check
          %p199 = pneg %p121
        $region22: #{tpu_custom_call.1} parent=11 // pred_check_branch
          %201 = sbr.rel (%p199) target = $region24
        $region23: #{tpu_custom_call.1} parent=11 // pred_region
          %s203 = ssub.s32 2048, 2048
          %204 = vsyncadd [#allocation8], %s203
          %s205 = sshll.u32 [#allocation9], 4
          %s206 = int_to_ptr.vmem [resolvable:$true] %s205
          %211 = dma.hbm_to_vmem [thread:$0]  %s3, 2048, %s206, [#allocation8], 64, 64, 4
        $region24: #{tpu_custom_call.1} parent=11 // pred_fallthru
          _
        // Predicated region
        $region25: #{tpu_custom_call.1} parent=11 // pred_check
          %p212 = pneg %p142
        $region26: #{tpu_custom_call.1} parent=11 // pred_check_branch
          %214 = sbr.rel (%p212) target = $region28
        $region27: #{tpu_custom_call.1} parent=11 // pred_region
          _
        $region28: #{tpu_custom_call.1} parent=11 // pred_fallthru
          _
      $region12: #{tpu_custom_call.1} parent=5 // pred_fallthru
        _
      %p215 = scmp.lt.s32.totalorder %s18, 8
      // Predicated region
      $region29: #{tpu_custom_call.1} parent=5 // pred_check
        %p216 = pneg %p215
      $region30: #{tpu_custom_call.1} parent=5 // pred_check_branch
        %218 = sbr.rel (%p216) target = $region32
      $region31: #{tpu_custom_call.1} parent=5 // pred_region
        // Predicated region
        $region33: #{tpu_custom_call.1} parent=31 // pred_check
          %p219 = pneg %p52
        $region34: #{tpu_custom_call.1} parent=31 // pred_check_branch
          %221 = sbr.rel (%p219) target = $region36
        $region35: #{tpu_custom_call.1} parent=31 // pred_region
          %s222 = sand.u32 %s42, 1
          %s223 = scalar_lea.sflag [#allocation5], %s222
          %s224 = sand.u32 %s42, 1
          %s225 = smul.addr %s224, 32
          %s226 = scalar_lea.vmem [#allocation4], %s225
          %s227 = smul.u32 4, %s26
          %s229 = ssub.s32 512, 512
          %230 = vsyncadd %s223, %s229
          %s231 = smul.addr %s25, 16
          %s232 = sadd.s32 %s227, %s231
          %s233 = smul.addr %s232, 128
          %s234 = scalar_lea.hbm %s0, %s233
          %s235 = sshll.u32 %s226, 4
          %s236 = int_to_ptr.vmem [resolvable:$true] %s235
          %241 = dma.hbm_to_vmem [thread:$0]  %s234, 512, %s236, %s223, 128, 128, 8
        $region36: #{tpu_custom_call.1} parent=31 // pred_fallthru
          _
      $region32: #{tpu_custom_call.1} parent=5 // pred_fallthru
        _
      %p242 = scmp.le.s32.totalorder 1, %s18
      %p243 = scmp.lt.s32.totalorder %s18, 9
      %p244 = pnand %p242, %p243
      %p245 = pneg %p244
      // Predicated region
      $region37: #{tpu_custom_call.1} parent=5 // pred_check
        _
      $region38: #{tpu_custom_call.1} parent=5 // pred_check_branch
        %247 = sbr.rel (%p244) target = $region40
      $region39: #{tpu_custom_call.1} parent=5 // pred_region
        %s248 = ssub.s32 %s18, 1
        %s249 = sand.u32 %s45, 1
        %s250 = scalar_lea.sflag [#allocation5], %s249
        %s251 = sand.u32 %s45, 1
        %s252 = smul.addr %s251, 32
        %s253 = scalar_lea.vmem [#allocation4], %s252
        // Predicated region
        $region41: #{tpu_custom_call.1} parent=39 // pred_check
          %p254 = pneg %p58
        $region42: #{tpu_custom_call.1} parent=39 // pred_check_branch
          %256 = sbr.rel (%p254) target = $region44
        $region43: #{tpu_custom_call.1} parent=39 // pred_region
          %257 = dma.done %s250, 512
        $region44: #{tpu_custom_call.1} parent=39 // pred_fallthru
          _
        // Predicated region
        $region45: #{tpu_custom_call.1} parent=39 // pred_check
          %p258 = pneg %p79
        $region46: #{tpu_custom_call.1} parent=39 // pred_check_branch
          %260 = sbr.rel (%p258) target = $region48
        $region47: #{tpu_custom_call.1} parent=39 // pred_region
          %261 = dma.done [#allocation8], 2048
        $region48: #{tpu_custom_call.1} parent=39 // pred_fallthru
          _
        // Predicated region
        $region49: #{tpu_custom_call.1} parent=39 // pred_check
          %p262 = pneg %p121
        $region50: #{tpu_custom_call.1} parent=39 // pred_check_branch
          %264 = sbr.rel (%p262) target = $region52
        $region51: #{tpu_custom_call.1} parent=39 // pred_region
          %265 = dma.done [#allocation8], 2048
        $region52: #{tpu_custom_call.1} parent=39 // pred_fallthru
          _
        %s266 = sand.u32 %s45, 1
        %s267 = scalar_lea.sflag [#allocation5], %s266
        %s268 = sand.u32 %s45, 1
        %s269 = smul.addr %s268, 32
        %s270 = scalar_lea.vmem [#allocation4], %s269
        %p271 = pneg %p58
        %p272 = pneg %p55
        %p273 = pneg %p79
        %p274 = pneg %p76
        %p275 = pneg %p100
        %p276 = pneg %p97
        %p277 = pneg %p121
        %p278 = pneg %p118
        %p279 = pneg %p142
        %p280 = pneg %p139
        %p281 = pneg %p168
        %p282 = pneg %p165
        %s283 = sand.u32 %s155, 1
        %s284 = scalar_lea.sflag [#allocation6], %s283
        %s285 = sand.u32 %s155, 1
        %s286 = smul.addr %s285, 128
        %s287 = scalar_lea.vmem [#allocation10], %s286
        %s288 = smul.u32 4, %s28
        %p290 = scmp.eq.s32.totalorder %s28, 0
        // Predicated region
        $region53: #{tpu_custom_call.1} parent=39 // pred_check
          %p291 = pneg %p290
        $region54: #{tpu_custom_call.1} parent=39 // pred_check_branch
          %293 = sbr.rel (%p291) target = $region56
        $region55: #{tpu_custom_call.1} parent=39 // pred_region
          %294 = vst [vmem:[#allocation2] sm:$0x1] 0.0
          %295 = vst [vmem:[#allocation3] sm:$0x1] 0.0
        $region56: #{tpu_custom_call.1} parent=39 // pred_fallthru
          _
        %v296 = vld [vmem:[%s253] sm:$0xff]
        %v297 = vld [vmem:[%s253 + $0x8] sm:$0xff]
        %v298 = vld [vmem:[%s253 + $0x10] sm:$0xff]
        %v299 = vld [vmem:[%s253 + $0x18] sm:$0xff]
        %v300 = vpack.c.bf16 %v297, %v296
        %v301 = vpack.c.bf16 %v299, %v298
        %v302 = vld [vmem:[#allocation7] sm:$0xff]
        %v303 = vld [vmem:[#allocation7 + $0x8] sm:$0xff]
        %v304 = vld [vmem:[#allocation7 + $0x10] sm:$0xff]
        %v305 = vld [vmem:[#allocation7 + $0x18] sm:$0xff]
        %v306 = vld [vmem:[#allocation7 + $0x20] sm:$0xff]
        %v307 = vld [vmem:[#allocation7 + $0x28] sm:$0xff]
        %v308 = vld [vmem:[#allocation7 + $0x30] sm:$0xff]
        %v309 = vld [vmem:[#allocation7 + $0x38] sm:$0xff]
        %v310 = vld [vmem:[#allocation7 + $0x40] sm:$0xff]
        %v311 = vld [vmem:[#allocation7 + $0x48] sm:$0xff]
        %v312 = vld [vmem:[#allocation7 + $0x50] sm:$0xff]
        %v313 = vld [vmem:[#allocation7 + $0x58] sm:$0xff]
        %v314 = vld [vmem:[#allocation7 + $0x60] sm:$0xff]
        %v315 = vld [vmem:[#allocation7 + $0x68] sm:$0xff]
        %v316 = vld [vmem:[#allocation7 + $0x70] sm:$0xff]
        %v317 = vld [vmem:[#allocation7 + $0x78] sm:$0xff]
        %v318 = vld [vmem:[%s2] sm:$0x3]
        %v320 = vlaneseq
        %v321 = vshrl.u32 %v320, 7
        %v322 = vsub.s32 0, %v321
        %v323 = vrot.slane %v318, %v322
        %v324 = vlaneseq
        %v325 = vshrl.u32 %v324, 7
        %v326 = vsub.s32 1, %v325
        %v327 = vrot.slane %v318, %v326
        %v346 = vunpack.c.l.b16 %v302
        %v347 = vunpack.c.h.b16 %v302
        %v348 = vunpack.c.l.b16 %v303
        %v349 = vunpack.c.h.b16 %v303
        %v350 = vunpack.c.l.b16 %v304
        %v351 = vunpack.c.h.b16 %v304
        %v352 = vunpack.c.l.b16 %v305
        %v353 = vunpack.c.h.b16 %v305
        %v354 = vunpack.c.l.b16 %v306
        %v355 = vunpack.c.h.b16 %v306
        %v356 = vunpack.c.l.b16 %v307
        %v357 = vunpack.c.h.b16 %v307
        %v358 = vunpack.c.l.b16 %v308
        %v359 = vunpack.c.h.b16 %v308
        %v360 = vunpack.c.l.b16 %v309
        %v361 = vunpack.c.h.b16 %v309
        %v362 = vunpack.c.l.b16 %v310
        %v363 = vunpack.c.h.b16 %v310
        %v364 = vunpack.c.l.b16 %v311
        %v365 = vunpack.c.h.b16 %v311
        %v366 = vunpack.c.l.b16 %v312
        %v367 = vunpack.c.h.b16 %v312
        %v368 = vunpack.c.l.b16 %v313
        %v369 = vunpack.c.h.b16 %v313
        %v370 = vunpack.c.l.b16 %v314
        %v371 = vunpack.c.h.b16 %v314
        %v372 = vunpack.c.l.b16 %v315
        %v373 = vunpack.c.h.b16 %v315
        %v374 = vunpack.c.l.b16 %v316
        %v375 = vunpack.c.h.b16 %v316
        %v376 = vunpack.c.l.b16 %v317
        %v377 = vunpack.c.h.b16 %v317
        %v378 = vpack.c.b16 %v348, %v346
        %v379 = vpack.c.b16 %v349, %v347
        %v380 = vpack.c.b16 %v352, %v350
        %v381 = vpack.c.b16 %v353, %v351
        %v382 = vpack.c.b16 %v356, %v354
        %v383 = vpack.c.b16 %v357, %v355
        %v384 = vpack.c.b16 %v360, %v358
        %v385 = vpack.c.b16 %v361, %v359
        %v386 = vpack.c.b16 %v364, %v362
        %v387 = vpack.c.b16 %v365, %v363
        %v388 = vpack.c.b16 %v368, %v366
        %v389 = vpack.c.b16 %v369, %v367
        %v390 = vpack.c.b16 %v372, %v370
        %v391 = vpack.c.b16 %v373, %v371
        %v392 = vpack.c.b16 %v376, %v374
        %v393 = vpack.c.b16 %v377, %v375
        %410 = vmatprep.subr.bf16.mxu0 %v393
        %411 = vmatpush1.bf16.msra.mxu0 %v392
        %412 = vmatprep.subr.bf16.mxu0 %v391
        %413 = vmatpush1.bf16.msra.mxu0 %v390
        %414 = vmatprep.subr.bf16.mxu0 %v389
        %415 = vmatpush1.bf16.msra.mxu0 %v388
        %416 = vmatprep.subr.bf16.mxu0 %v387
        %417 = vmatpush1.bf16.msra.mxu0 %v386
        %418 = vmatprep.subr.bf16.mxu0 %v385
        %419 = vmatpush1.bf16.msra.mxu0 %v384
        %420 = vmatprep.subr.bf16.mxu0 %v383
        %421 = vmatpush1.bf16.msra.mxu0 %v382
        %422 = vmatprep.subr.bf16.mxu0 %v381
        %423 = vmatpush1.bf16.msra.mxu0 %v380
        %424 = vmatprep.subr.bf16.mxu0 %v379
        %425 = vmatpush1.bf16.msra.mxu0 %v378
        %426 = vmatprep.subr.bf16.mxu0 0
        %427 = vmatpush2.bf16.msra.mxu0 0
        %428 = vmatprep.subr.bf16.mxu0 0
        %429 = vmatpush2.bf16.msra.mxu0 0
        %430 = vmatprep.subr.bf16.mxu0 0
        %431 = vmatpush2.bf16.msra.mxu0 0
        %432 = vmatprep.subr.bf16.mxu0 0
        %433 = vmatpush2.bf16.msra.mxu0 0
        %434 = vmatprep.subr.bf16.mxu0 0
        %435 = vmatpush2.bf16.msra.mxu0 0
        %436 = vmatprep.subr.bf16.mxu0 0
        %437 = vmatpush2.bf16.msra.mxu0 0
        %438 = vmatprep.subr.bf16.mxu0 0
        %439 = vmatpush2.bf16.msra.mxu0 0
        %440 = vmatprep.subr.bf16.mxu0 0
        %441 = vmatpush2.bf16.msra.mxu0 0
        %442 = vmatprep.mubr.bf16.mxu0 0
        %443 = vmatmul.mubr.bf16.gmra.mxu0 %v300
        %v444 = vpop.f32.mrf.mxu0
        %v445 = vadd.f32 %v323, %v444
        %v446 = vpop.f32.mrf.mxu0
        %v447 = vadd.f32 %v327, %v446
        %v448 = vpop.f32.mrf.mxu0
        %v449 = vadd.f32 %v323, %v448
        %v450 = vpop.f32.mrf.mxu0
        %v451 = vadd.f32 %v327, %v450
        %452 = vmatprep.mubr.bf16.mxu0 0
        %453 = vmatmul.mubr.bf16.gmra.mxu0 %v301
        %v454 = vpop.f32.mrf.mxu0
        %v455 = vadd.f32 %v323, %v454
        %v456 = vpop.f32.mrf.mxu0
        %v457 = vadd.f32 %v327, %v456
        %v458 = vpop.f32.mrf.mxu0
        %v459 = vadd.f32 %v323, %v458
        %v460 = vpop.f32.mrf.mxu0
        %v461 = vadd.f32 %v327, %v460
        %462 = vdwg.mxu0
        %v463 = vmax.f32 %v445, 0.0
        %v464 = vmax.f32 %v447, 0.0
        %v465 = vmax.f32 %v449, 0.0
        %v466 = vmax.f32 %v451, 0.0
        %v467 = vmax.f32 %v455, 0.0
        %v468 = vmax.f32 %v457, 0.0
        %v469 = vmax.f32 %v459, 0.0
        %v470 = vmax.f32 %v461, 0.0
        %v471 = vpack.c.bf16 %v465, %v463
        %v472 = vpack.c.bf16 %v466, %v464
        %v473 = vpack.c.bf16 %v469, %v467
        %v474 = vpack.c.bf16 %v470, %v468
        %v475 = vld [vmem:[#allocation9] sm:$0xf]
        %v476 = vld [vmem:[#allocation9 + $0x4] sm:$0xf]
        %v477 = vld [vmem:[#allocation9 + $0x8] sm:$0xf]
        %v478 = vld [vmem:[#allocation9 + $0xc] sm:$0xf]
        %v479 = vld [vmem:[#allocation9 + $0x10] sm:$0xf]
        %v480 = vld [vmem:[#allocation9 + $0x14] sm:$0xf]
        %v481 = vld [vmem:[#allocation9 + $0x18] sm:$0xf]
        %v482 = vld [vmem:[#allocation9 + $0x1c] sm:$0xf]
        %v483 = vld [vmem:[#allocation9 + $0x20] sm:$0xf]
        %v484 = vld [vmem:[#allocation9 + $0x24] sm:$0xf]
        %v485 = vld [vmem:[#allocation9 + $0x28] sm:$0xf]
        %v486 = vld [vmem:[#allocation9 + $0x2c] sm:$0xf]
        %v487 = vld [vmem:[#allocation9 + $0x30] sm:$0xf]
        %v488 = vld [vmem:[#allocation9 + $0x34] sm:$0xf]
        %v489 = vld [vmem:[#allocation9 + $0x38] sm:$0xf]
        %v490 = vld [vmem:[#allocation9 + $0x3c] sm:$0xf]
        %v491 = vld [vmem:[#allocation9 + $0x40] sm:$0xf]
        %v492 = vld [vmem:[#allocation9 + $0x44] sm:$0xf]
        %v493 = vld [vmem:[#allocation9 + $0x48] sm:$0xf]
        %v494 = vld [vmem:[#allocation9 + $0x4c] sm:$0xf]
        %v495 = vld [vmem:[#allocation9 + $0x50] sm:$0xf]
        %v496 = vld [vmem:[#allocation9 + $0x54] sm:$0xf]
        %v497 = vld [vmem:[#allocation9 + $0x58] sm:$0xf]
        %v498 = vld [vmem:[#allocation9 + $0x5c] sm:$0xf]
        %v499 = vld [vmem:[#allocation9 + $0x60] sm:$0xf]
        %v500 = vld [vmem:[#allocation9 + $0x64] sm:$0xf]
        %v501 = vld [vmem:[#allocation9 + $0x68] sm:$0xf]
        %v502 = vld [vmem:[#allocation9 + $0x6c] sm:$0xf]
        %v503 = vld [vmem:[#allocation9 + $0x70] sm:$0xf]
        %v504 = vld [vmem:[#allocation9 + $0x74] sm:$0xf]
        %v505 = vld [vmem:[#allocation9 + $0x78] sm:$0xf]
        %v506 = vld [vmem:[#allocation9 + $0x7c] sm:$0xf]
        %v507 = vld [vmem:[%s4] sm:$0x1]
        %v509 = vlaneseq
        %v510 = vshrl.u32 %v509, 7
        %v511 = vsub.s32 0, %v510
        %v512 = vrot.slane %v507, %v511
        %v546 = vunpack.c.l.b16 %v475
        %v547 = vunpack.c.l.b16 %v476
        %v548 = vunpack.c.l.b16 %v477
        %v549 = vunpack.c.l.b16 %v478
        %v550 = vunpack.c.l.b16 %v479
        %v551 = vunpack.c.l.b16 %v480
        %v552 = vunpack.c.l.b16 %v481
        %v553 = vunpack.c.l.b16 %v482
        %v554 = vunpack.c.l.b16 %v483
        %v555 = vunpack.c.l.b16 %v484
        %v556 = vunpack.c.l.b16 %v485
        %v557 = vunpack.c.l.b16 %v486
        %v558 = vunpack.c.l.b16 %v487
        %v559 = vunpack.c.l.b16 %v488
        %v560 = vunpack.c.l.b16 %v489
        %v561 = vunpack.c.l.b16 %v490
        %v562 = vunpack.c.l.b16 %v491
        %v563 = vunpack.c.l.b16 %v492
        %v564 = vunpack.c.l.b16 %v493
        %v565 = vunpack.c.l.b16 %v494
        %v566 = vunpack.c.l.b16 %v495
        %v567 = vunpack.c.l.b16 %v496
        %v568 = vunpack.c.l.b16 %v497
        %v569 = vunpack.c.l.b16 %v498
        %v570 = vunpack.c.l.b16 %v499
        %v571 = vunpack.c.l.b16 %v500
        %v572 = vunpack.c.l.b16 %v501
        %v573 = vunpack.c.l.b16 %v502
        %v574 = vunpack.c.l.b16 %v503
        %v575 = vunpack.c.l.b16 %v504
        %v576 = vunpack.c.l.b16 %v505
        %v577 = vunpack.c.l.b16 %v506
        %v578 = vpack.c.b16 %v547, %v546
        %v579 = vpack.c.b16 %v549, %v548
        %v580 = vpack.c.b16 %v551, %v550
        %v581 = vpack.c.b16 %v553, %v552
        %v582 = vpack.c.b16 %v555, %v554
        %v583 = vpack.c.b16 %v557, %v556
        %v584 = vpack.c.b16 %v559, %v558
        %v585 = vpack.c.b16 %v561, %v560
        %v586 = vpack.c.b16 %v563, %v562
        %v587 = vpack.c.b16 %v565, %v564
        %v588 = vpack.c.b16 %v567, %v566
        %v589 = vpack.c.b16 %v569, %v568
        %v590 = vpack.c.b16 %v571, %v570
        %v591 = vpack.c.b16 %v573, %v572
        %v592 = vpack.c.b16 %v575, %v574
        %v593 = vpack.c.b16 %v577, %v576
        %610 = vmatprep.subr.bf16.mxu0 0
        %611 = vmatpush1.bf16.msra.mxu0 %v585
        %612 = vmatprep.subr.bf16.mxu0 0
        %613 = vmatpush1.bf16.msra.mxu0 %v584
        %614 = vmatprep.subr.bf16.mxu0 0
        %615 = vmatpush1.bf16.msra.mxu0 %v583
        %616 = vmatprep.subr.bf16.mxu0 0
        %617 = vmatpush1.bf16.msra.mxu0 %v582
        %618 = vmatprep.subr.bf16.mxu0 0
        %619 = vmatpush1.bf16.msra.mxu0 %v581
        %620 = vmatprep.subr.bf16.mxu0 0
        %621 = vmatpush1.bf16.msra.mxu0 %v580
        %622 = vmatprep.subr.bf16.mxu0 0
        %623 = vmatpush1.bf16.msra.mxu0 %v579
        %624 = vmatprep.subr.bf16.mxu0 0
        %625 = vmatpush1.bf16.msra.mxu0 %v578
        %626 = vmatprep.subr.bf16.mxu0 0
        %627 = vmatpush2.bf16.msra.mxu0 %v593
        %628 = vmatprep.subr.bf16.mxu0 0
        %629 = vmatpush2.bf16.msra.mxu0 %v592
        %630 = vmatprep.subr.bf16.mxu0 0
        %631 = vmatpush2.bf16.msra.mxu0 %v591
        %632 = vmatprep.subr.bf16.mxu0 0
        %633 = vmatpush2.bf16.msra.mxu0 %v590
        %634 = vmatprep.subr.bf16.mxu0 0
        %635 = vmatpush2.bf16.msra.mxu0 %v589
        %636 = vmatprep.subr.bf16.mxu0 0
        %637 = vmatpush2.bf16.msra.mxu0 %v588
        %638 = vmatprep.subr.bf16.mxu0 0
        %639 = vmatpush2.bf16.msra.mxu0 %v587
        %640 = vmatprep.subr.bf16.mxu0 0
        %641 = vmatpush2.bf16.msra.mxu0 %v586
        %642 = vmatprep.mubr.bf16.mxu0 %v472
        %643 = vmatmul.mubr.bf16.gmra.mxu0 %v471
        %v644 = vpop.f32.mrf.mxu0
        %v645 = vadd.f32 %v512, %v644
        %v646 = vpop.f32.mrf.mxu0
        %v647 = vpop.f32.mrf.mxu0
        %v648 = vadd.f32 %v512, %v647
        %v649 = vpop.f32.mrf.mxu0
        %650 = vmatprep.mubr.bf16.mxu0 %v474
        %651 = vmatmul.mubr.bf16.gmra.mxu0 %v473
        %v652 = vpop.f32.mrf.mxu0
        %v653 = vadd.f32 %v512, %v652
        %v654 = vpop.f32.mrf.mxu0
        %v655 = vpop.f32.mrf.mxu0
        %v656 = vadd.f32 %v512, %v655
        %v657 = vpop.f32.mrf.mxu0
        %658 = vdwg.mxu0
        %v659 = vadd.f32 %v645, %v296
        %v660 = vadd.f32 %v648, %v297
        %v661 = vadd.f32 %v653, %v298
        %v662 = vadd.f32 %v656, %v299
        %v663 = vld [vmem:[#allocation2] sm:$0x1]
        %v664 = vadd.f32 %v659, %v660
        %v665 = vadd.f32 %v664, %v661
        %v666 = vadd.f32 %v665, %v662
        %v667 = vrot.slane %v666, 4
        %v668 = vadd.f32 %v666, %v667
        %v669 = vrot.slane %v668, 2
        %v670 = vadd.f32 %v668, %v669
        %v671 = vrot.slane %v670, 1
        %v672 = vadd.f32 %v670, %v671
        %v673 = vadd.f32 %v663, %v672
        %674 = vst [vmem:[#allocation2] sm:$0x1] %v673
        %v675 = vld [vmem:[#allocation3] sm:$0x1]
        %v676 = vmul.f32 %v659, %v659
        %v677 = vmul.f32 %v660, %v660
        %v678 = vmul.f32 %v661, %v661
        %v679 = vmul.f32 %v662, %v662
        %v680 = vadd.f32 %v676, %v677
        %v681 = vadd.f32 %v680, %v678
        %v682 = vadd.f32 %v681, %v679
        %v683 = vrot.slane %v682, 4
        %v684 = vadd.f32 %v682, %v683
        %v685 = vrot.slane %v684, 2
        %v686 = vadd.f32 %v684, %v685
        %v687 = vrot.slane %v686, 1
        %v688 = vadd.f32 %v686, %v687
        %v689 = vadd.f32 %v675, %v688
        %690 = vst [vmem:[#allocation3] sm:$0x1] %v689
        %s691 = smul.u32 %s28, 32
        %s692 = scalar_lea.vmem %s287, %s691 [#allocation10]
        %693 = vst [vmem:[%s692] sm:$0xff] %v659
        %694 = vst [vmem:[%s692 + $0x8] sm:$0xff] %v660
        %695 = vst [vmem:[%s692 + $0x10] sm:$0xff] %v661
        %696 = vst [vmem:[%s692 + $0x18] sm:$0xff] %v662
        %p697 = scmp.eq.s32.totalorder %s28, 3
        // Predicated region
        $region57: #{tpu_custom_call.1} parent=39 // pred_check
          %p698 = pneg %p697
        $region58: #{tpu_custom_call.1} parent=39 // pred_check_branch
          %700 = sbr.rel (%p698) target = $region60
        $region59: #{tpu_custom_call.1} parent=39 // pred_region
          %v701 = vld [vmem:[#allocation2] sm:$0x1]
          %vm702 = vcmask 1040384
          %v703 = vsel %vm702, %v701, 0.0
          %704 = vadd.xlane.f32.xlu0 %v703
          %v705 = vpop.xlane.xlu0 %704
          %v706 = vld [vmem:[#allocation3] sm:$0x1]
          %v707 = vsel %vm702, %v706, 0.0
          %708 = vadd.xlane.f32.xlu0 %v707
          %v709 = vpop.xlane.xlu0 %708
          %v710 = vrcp.pop 16384.0
          %v711 = vmul.f32 %v705, %v710
          %v712 = vmul.f32 %v711, 16384.0
          %v713 = vmul.f32 %v712, %v711
          %v714 = vsub.f32 %v709, %v713
          %v715 = vrcp.pop 16383.0
          %v716 = vmul.f32 %v714, %v715
          %v717 = vadd.f32 %v716, 1e-05
          %v718 = vrsqrt.pop %v717
          %v719 = vld [vmem:[%s287] sm:$0xff]
          %v720 = vld [vmem:[%s287 + $0x8] sm:$0xff]
          %v721 = vld [vmem:[%s287 + $0x10] sm:$0xff]
          %v722 = vld [vmem:[%s287 + $0x18] sm:$0xff]
          %v723 = vld [vmem:[%s287 + $0x20] sm:$0xff]
          %v724 = vld [vmem:[%s287 + $0x28] sm:$0xff]
          %v725 = vld [vmem:[%s287 + $0x30] sm:$0xff]
          %v726 = vld [vmem:[%s287 + $0x38] sm:$0xff]
          %v727 = vld [vmem:[%s287 + $0x40] sm:$0xff]
          %v728 = vld [vmem:[%s287 + $0x48] sm:$0xff]
          %v729 = vld [vmem:[%s287 + $0x50] sm:$0xff]
          %v730 = vld [vmem:[%s287 + $0x58] sm:$0xff]
          %v731 = vld [vmem:[%s287 + $0x60] sm:$0xff]
          %v732 = vld [vmem:[%s287 + $0x68] sm:$0xff]
          %v733 = vld [vmem:[%s287 + $0x70] sm:$0xff]
          %v734 = vld [vmem:[%s287 + $0x78] sm:$0xff]
          %v735 = vlaneseq
          %v736 = vshrl.u32 %v735, 7
          %v737 = vsub.s32 0, %v736
          %v738 = vrot.slane %v711, %v737
          %v739 = vsub.f32 %v719, %v738
          %v740 = vsub.f32 %v720, %v738
          %v741 = vsub.f32 %v721, %v738
          %v742 = vsub.f32 %v722, %v738
          %v743 = vsub.f32 %v723, %v738
          %v744 = vsub.f32 %v724, %v738
          %v745 = vsub.f32 %v725, %v738
          %v746 = vsub.f32 %v726, %v738
          %v747 = vsub.f32 %v727, %v738
          %v748 = vsub.f32 %v728, %v738
          %v749 = vsub.f32 %v729, %v738
          %v750 = vsub.f32 %v730, %v738
          %v751 = vsub.f32 %v731, %v738
          %v752 = vsub.f32 %v732, %v738
          %v753 = vsub.f32 %v733, %v738
          %v754 = vsub.f32 %v734, %v738
          %v755 = vlaneseq
          %v756 = vshrl.u32 %v755, 7
          %v757 = vsub.s32 0, %v756
          %v758 = vrot.slane %v718, %v757
          %v759 = vmul.f32 %v739, %v758
          %v760 = vmul.f32 %v740, %v758
          %v761 = vmul.f32 %v741, %v758
          %v762 = vmul.f32 %v742, %v758
          %v763 = vmul.f32 %v743, %v758
          %v764 = vmul.f32 %v744, %v758
          %v765 = vmul.f32 %v745, %v758
          %v766 = vmul.f32 %v746, %v758
          %v767 = vmul.f32 %v747, %v758
          %v768 = vmul.f32 %v748, %v758
          %v769 = vmul.f32 %v749, %v758
          %v770 = vmul.f32 %v750, %v758
          %v771 = vmul.f32 %v751, %v758
          %v772 = vmul.f32 %v752, %v758
          %v773 = vmul.f32 %v753, %v758
          %v774 = vmul.f32 %v754, %v758
          %775 = vst [vmem:[%s287] sm:$0xff] %v759
          %776 = vst [vmem:[%s287 + $0x8] sm:$0xff] %v760
          %777 = vst [vmem:[%s287 + $0x10] sm:$0xff] %v761
          %778 = vst [vmem:[%s287 + $0x18] sm:$0xff] %v762
          %779 = vst [vmem:[%s287 + $0x20] sm:$0xff] %v763
          %780 = vst [vmem:[%s287 + $0x28] sm:$0xff] %v764
          %781 = vst [vmem:[%s287 + $0x30] sm:$0xff] %v765
          %782 = vst [vmem:[%s287 + $0x38] sm:$0xff] %v766
          %783 = vst [vmem:[%s287 + $0x40] sm:$0xff] %v767
          %784 = vst [vmem:[%s287 + $0x48] sm:$0xff] %v768
          %785 = vst [vmem:[%s287 + $0x50] sm:$0xff] %v769
          %786 = vst [vmem:[%s287 + $0x58] sm:$0xff] %v770
          %787 = vst [vmem:[%s287 + $0x60] sm:$0xff] %v771
          %788 = vst [vmem:[%s287 + $0x68] sm:$0xff] %v772
          %789 = vst [vmem:[%s287 + $0x70] sm:$0xff] %v773
          %790 = vst [vmem:[%s287 + $0x78] sm:$0xff] %v774
        $region60: #{tpu_custom_call.1} parent=39 // pred_fallthru
          _
        %s791 = sand.u32 %s155, 1
        %s792 = scalar_lea.sflag [#allocation6], %s791
        %s793 = sand.u32 %s155, 1
        %s794 = smul.addr %s793, 128
        %s795 = scalar_lea.vmem [#allocation10], %s794
        // Predicated region
        $region61: #{tpu_custom_call.1} parent=39 // pred_check
          %p796 = pneg %p165
        $region62: #{tpu_custom_call.1} parent=39 // pred_check_branch
          %798 = sbr.rel (%p796) target = $region64
        $region63: #{tpu_custom_call.1} parent=39 // pred_region
          %s800 = ssub.s32 2048, 2048
          %801 = vsyncadd %s792, %s800
          %s802 = smul.addr %s27, 16
          %s803 = smul.addr %s802, 128
          %s804 = scalar_lea.hbm %s5, %s803
          %s805 = sshll.u32 %s795, 4
          %s806 = int_to_ptr.vmem [resolvable:$true] %s805
          %811 = dma.vmem_to_hbm [thread:$0]  %s806, 2048, %s804, %s792, 128, 128, 8
        $region64: #{tpu_custom_call.1} parent=39 // pred_fallthru
          _
      $region40: #{tpu_custom_call.1} parent=5 // pred_fallthru
        _
      %p812 = scmp.le.s32.totalorder 2, %s18
      // Predicated region
      $region65: #{tpu_custom_call.1} parent=5 // pred_check
        %p813 = pneg %p812
      $region66: #{tpu_custom_call.1} parent=5 // pred_check_branch
        %815 = sbr.rel (%p813) target = $region68
      $region67: #{tpu_custom_call.1} parent=5 // pred_region
        %s816 = ssub.s32 %s18, 2
        // Predicated region
        $region69: #{tpu_custom_call.1} parent=67 // pred_check
          %p817 = pneg %p171
        $region70: #{tpu_custom_call.1} parent=67 // pred_check_branch
          %819 = sbr.rel (%p817) target = $region72
        $region71: #{tpu_custom_call.1} parent=67 // pred_region
          %s820 = sand.u32 %s156, 1
          %s821 = scalar_lea.sflag [#allocation6], %s820
          %s822 = sand.u32 %s156, 1
          %s823 = smul.addr %s822, 128
          %s824 = scalar_lea.vmem [#allocation10], %s823
          %825 = dma.done %s821, 2048
        $region72: #{tpu_custom_call.1} parent=67 // pred_fallthru
          _
      $region68: #{tpu_custom_call.1} parent=5 // pred_fallthru
        _
    $region6: #{tpu_custom_call.1} parent=1 // loop_footer
      %s22 = sadd.s32 1, %s18
    $region7: #{tpu_custom_call.1} parent=1 // loop_footer_branch
      %17 = sbr.rel target = $region3
    $region8: #{tpu_custom_call.1} parent=1 // loop_exit
      _
    %826 = vsyncpa [#allocation5], 1
    %s827 = scalar_lea.sflag [#allocation5], 1
    %828 = vsyncpa %s827, 1
    %829 = vsyncpa [#allocation8], 1
    %830 = vsyncpa [#allocation6], 1
    %s831 = scalar_lea.sflag [#allocation6], 1
    %832 = vsyncpa %s831, 1

</llo_original>
